<compile_context>
chip_gen: v5e
topology: v5e:2x2
jax: 0.10.0
libtpu: 0.0.40
codegen_flags: <defaults>
</compile_context>

<pallas_src>
import functools
import math

import numpy as np

import jax
import jax.numpy as jnp
from jax import lax
from jax.experimental import pallas as pl
from jax.experimental.pallas import tpu as pltpu

_VMEM_SPEC = pl.BlockSpec(memory_space=pltpu.MemorySpace.VMEM)
_LN_EPS = 1e-5
_NEG_BIG = -1e30  # bias for padded output lanes -> exp() == 0 in the softmax


def _round_up(x, m):
    return ((x + m - 1) // m) * m


def _vmem_limit_bytes():
    """~3/4 of physical VMEM (96 MiB on v5e/v6e, 48 MiB on v7x); safe fallback."""
    try:
        cap = int(pltpu.get_tpu_info().vmem_capacity_bytes)
    except Exception:
        cap = 64 * 1024 * 1024
    return max(32 * 1024 * 1024, (cap * 3) // 4)


# ---------------------------------------------------------------------------
# Host-side parameter packing: 46 tensors -> 2 slabs (+ static layout dicts)
# ---------------------------------------------------------------------------
class _SlabPacker:
    """Packs 2-D matrices into one [rows, width] slab.

    Each entry starts at a sublane-aligned (multiple of 8) row offset and is
    zero-padded to `width` columns.  Layout entries are (row_off, nrows, ncols).
    """

    def __init__(self, width, dtype):
        self._width = width
        self._dtype = dtype
        self._chunks = []
        self._layout = {}
        self._rows = 0

    def add(self, name, mat):
        mat = np.asarray(mat, dtype=np.float32)
        nr, nc = mat.shape
        assert nc <= self._width, (name, nc, self._width)
        buf = np.zeros((_round_up(nr, 8), self._width), np.float32)
        buf[:nr, :nc] = mat
        self._layout[name] = (self._rows, nr, nc)
        self._chunks.append(buf)
        self._rows += buf.shape[0]

    def finalize(self):
        slab = np.concatenate(self._chunks, axis=0)
        return jnp.asarray(slab).astype(self._dtype), self._layout


def pack_graph_attention_params(params):
    """Packs raw f32 params into (bf16 weight slab, f32 bias/LN slab, meta)."""
    hidden = params["node_w2"].shape[1]
    out_size = params["out_w"].shape[1]
    out_pad = _round_up(out_size, 128)
    n_blocks = len(params["blocks"])
    inv_sqrt_h = 1.0 / math.sqrt(hidden)

    w_width = max(128, _round_up(3 * hidden, 128), out_pad)
    b_width = max(128, _round_up(hidden, 128), out_pad)
    wp = _SlabPacker(w_width, jnp.bfloat16)
    bp = _SlabPacker(b_width, jnp.float32)

    # node / edge input transforms
    wp.add("node_w1", params["node_w1"])
    wp.add("node_w2", params["node_w2"])
    wp.add("edge_w1", params["edge_w1"])
    wp.add("edge_w2", params["edge_w2"])
    bp.add("node_b1", params["node_b1"])
    bp.add("node_b2", params["node_b2"])
    bp.add("edge_b1", params["edge_b1"])
    bp.add("edge_b2", params["edge_b2"])

    for i, blk in enumerate(params["blocks"]):
        e2v, v2e = blk["e2v"], blk["v2e"]
        # Per-input projection fusion:
        #   nodes are 'x' for e2v (needs q) and 'y' for v2e (needs k, v)
        #   edges are 'x' for v2e (needs q) and 'y' for e2v (needs k, v)
        # The 1/sqrt(hidden) attention scale is folded into wq at pack time.
        nodes_proj = np.concatenate(
            [np.asarray(e2v["wq"], np.float32) * inv_sqrt_h,
             np.asarray(v2e["wk"], np.float32),
             np.asarray(v2e["wv"], np.float32)], axis=1)
        edges_proj = np.concatenate(
            [np.asarray(v2e["wq"], np.float32) * inv_sqrt_h,
             np.asarray(e2v["wk"], np.float32),
             np.asarray(e2v["wv"], np.float32)], axis=1)
        wp.add(f"blk{i}_nodes_proj", nodes_proj)
        wp.add(f"blk{i}_edges_proj", edges_proj)
        for uname, unit in (("e2v", e2v), ("v2e", v2e)):
            wp.add(f"blk{i}_{uname}_wf1", unit["wf1"])
            wp.add(f"blk{i}_{uname}_wf2", unit["wf2"])
            bp.add(f"blk{i}_{uname}_ln1_w", unit["ln1_w"])
            bp.add(f"blk{i}_{uname}_ln1_b", unit["ln1_b"])
            bp.add(f"blk{i}_{uname}_ln2_w", unit["ln2_w"])
            bp.add(f"blk{i}_{uname}_ln2_b", unit["ln2_b"])

    # output linear padded to a lane-dense (128-multiple) width
    out_w_pad = np.zeros((hidden, out_pad), np.float32)
    out_w_pad[:, :out_size] = np.asarray(params["out_w"], np.float32)
    wp.add("out_w", out_w_pad)
    out_b_pad = np.full((1, out_pad), _NEG_BIG, np.float32)
    out_b_pad[0, :out_size] = np.asarray(params["out_b"], np.float32).reshape(-1)
    bp.add("out_b", out_b_pad)

    wslab, w_layout = wp.finalize()
    bslab, b_layout = bp.finalize()
    meta = dict(hidden=hidden, out_size=out_size, out_pad=out_pad,
                n_blocks=n_blocks, w_layout=w_layout, b_layout=b_layout)
    return wslab, bslab, meta


# ---------------------------------------------------------------------------
# In-kernel helpers (values, not refs)
# ---------------------------------------------------------------------------
def _layer_norm(z, w, b):
    mu = jnp.mean(z, axis=-1, keepdims=True)
    var = jnp.mean((z - mu) ** 2, axis=-1, keepdims=True)
    return (z - mu) * lax.rsqrt(var + _LN_EPS) * w + b


def _attention_core(x, q, k, v, mask, wf1, wf2, ln1w, ln1b, ln2w, ln2b):
    # score = q @ k.T, contracting the feature axis of both (no transpose copy).
    score = lax.dot_general(
        q.astype(jnp.bfloat16), k.astype(jnp.bfloat16),
        dimension_numbers=(((1,), (1,)), ((), ())),
        preferred_element_type=jnp.float32)

    # Masked softmax (reference formula) with a row-max subtraction for
    # numerical stability: exp(s-m)*mask / (sum(exp(s-m)*mask) + 1e-6).
    m = jnp.max(score, axis=1, keepdims=True)
    ex = jnp.exp(score - m) * mask
    denom = jnp.sum(ex, axis=1, keepdims=True) + 1e-6
    probs = ex / denom  # exact division (correctness feedback)

    x_atten = jnp.dot(probs.astype(jnp.bfloat16), v.astype(jnp.bfloat16),
                      preferred_element_type=jnp.float32)
    # dropout(p=0.4): identity in eval mode
    z = _layer_norm(x + x_atten, ln1w, ln1b)

    h = jnp.maximum(jnp.dot(z.astype(jnp.bfloat16), wf1,
                            preferred_element_type=jnp.float32), 0.0)
    ff = jnp.dot(h.astype(jnp.bfloat16), wf2,
                 preferred_element_type=jnp.float32)
    # dropout: identity in eval mode
    return _layer_norm(z + ff, ln2w, ln2b)


# ---------------------------------------------------------------------------
# Fused forward kernel: everything in one pallas_call, 5 input DMAs total
# ---------------------------------------------------------------------------
def _fused_forward_kernel(nodes_ref, edges_ref, inc_ref, wslab_ref, bslab_ref,
                          o_ref, *, w_layout, b_layout, n_blocks, hidden):
    def W(name):  # bf16 weight slice from the packed slab (static offsets)
        r0, nr, nc = w_layout[name]
        return wslab_ref[pl.ds(r0, nr), pl.ds(0, nc)]

    def B(name):  # f32 bias / LayerNorm row from the packed slab
        r0, nr, nc = b_layout[name]
        return bslab_ref[pl.ds(r0, nr), pl.ds(0, nc)]

    def mm(a, w_bf16):  # MXU matmul: bf16 operands, f32 accumulation
        return jnp.dot(a.astype(jnp.bfloat16), w_bf16,
                       preferred_element_type=jnp.float32)

    # --- incidence mask (bf16 0/1 input) and its transpose ------------------
    inc_bf = inc_ref[...]                       # [Nn, Ne] bf16
    inc = inc_bf.astype(jnp.float32)
    n_e = inc_bf.shape[1]
    # Exact transpose of the 0/1 mask via an identity matmul on the MXU
    # (avoids XLU transpose lowering for non-tile-aligned shapes).
    rows = lax.broadcasted_iota(jnp.int32, (n_e, n_e), 0)
    cols = lax.broadcasted_iota(jnp.int32, (n_e, n_e), 1)
    eye = jnp.where(rows == cols, 1.0, 0.0).astype(jnp.bfloat16)
    inc_t = lax.dot_general(eye, inc_bf,
                            dimension_numbers=(((1,), (1,)), ((), ())),
                            preferred_element_type=jnp.float32)   # [Ne, Nn]

    # --- node / edge MLP transforms: Linear(+bias) -> ReLU -> Linear(+bias) -
    nodes = mm(jnp.maximum(mm(nodes_ref[...], W("node_w1")) + B("node_b1"), 0.0),
               W("node_w2")) + B("node_b2")
    edges = mm(jnp.maximum(mm(edges_ref[...], W("edge_w1")) + B("edge_b1"), 0.0),
               W("edge_w2")) + B("edge_b2")

    # --- attention blocks (statically unrolled; all intermediates in VMEM) --
    h = hidden
    for i in range(n_blocks):
        # One wide projection per input instead of 6 narrow matmuls per block.
        nproj = mm(nodes, W(f"blk{i}_nodes_proj"))  # [Nn,3H]=[q_e2v|k_v2e|v_v2e]
        eproj = mm(edges, W(f"blk{i}_edges_proj"))  # [Ne,3H]=[q_v2e|k_e2v|v_e2v]

        new_nodes = _attention_core(
            nodes, nproj[:, 0:h], eproj[:, h:2 * h], eproj[:, 2 * h:3 * h], inc,
            W(f"blk{i}_e2v_wf1"), W(f"blk{i}_e2v_wf2"),
            B(f"blk{i}_e2v_ln1_w"), B(f"blk{i}_e2v_ln1_b"),
            B(f"blk{i}_e2v_ln2_w"), B(f"blk{i}_e2v_ln2_b"))
        new_edges = _attention_core(
            edges, eproj[:, 0:h], nproj[:, h:2 * h], nproj[:, 2 * h:3 * h], inc_t,
            W(f"blk{i}_v2e_wf1"), W(f"blk{i}_v2e_wf2"),
            B(f"blk{i}_v2e_ln1_w"), B(f"blk{i}_v2e_ln1_b"),
            B(f"blk{i}_v2e_ln2_w"), B(f"blk{i}_v2e_ln2_b"))
        nodes, edges = new_nodes, new_edges

    # --- output linear + softmax(dim=1), lane-dense store -------------------
    # Padded columns carry a -1e30 bias -> exp(...) == 0, softmax unchanged.
    logits = mm(edges, W("out_w")) + B("out_b")     # [Ne, out_pad]
    m = jnp.max(logits, axis=1, keepdims=True)
    e = jnp.exp(logits - m)
    o_ref[...] = e / jnp.sum(e, axis=1, keepdims=True)


def _cost_estimate(n_nodes, n_edges, n_node_feat, n_edge_feat, hidden, out_pad,
                   n_blocks, input_bytes):
    def mm(a, k, c):
        return 2 * a * k * c

    flops = mm(n_nodes, n_node_feat, hidden) + mm(n_nodes, hidden, hidden)
    flops += mm(n_edges, n_edge_feat, hidden) + mm(n_edges, hidden, hidden)
    flops += mm(n_edges, n_edges, n_nodes)               # in-kernel mask transpose
    per_block = (mm(n_nodes, hidden, 3 * hidden) + mm(n_edges, hidden, 3 * hidden)
                 + 2 * mm(n_nodes, hidden, n_edges)      # e2v scores + attn out
                 + 2 * mm(n_edges, hidden, n_nodes)      # v2e scores + attn out
                 + 2 * mm(n_nodes, hidden, hidden)       # e2v feed-forward
                 + 2 * mm(n_edges, hidden, hidden))      # v2e feed-forward
    flops += n_blocks * per_block
    flops += mm(n_edges, hidden, out_pad)
    transcendentals = n_blocks * 2 * n_nodes * n_edges + n_edges * out_pad
    bytes_accessed = input_bytes + n_edges * out_pad * 4
    return pl.CostEstimate(flops=flops, transcendentals=transcendentals,
                           bytes_accessed=bytes_accessed)


def build_graph_attention_forward(meta):
    """Returns a jitted fwd(wslab, bslab, nodes, edges, adjacency, incidence)."""
    hidden = meta["hidden"]
    out_size = meta["out_size"]
    out_pad = meta["out_pad"]
    n_blocks = meta["n_blocks"]
    kern = functools.partial(_fused_forward_kernel, w_layout=meta["w_layout"],
                             b_layout=meta["b_layout"], n_blocks=n_blocks,
                             hidden=hidden)
    vmem_limit = _vmem_limit_bytes()

    @jax.jit
    def forward(wslab, bslab, nodes, edges, adjacency, incidence):
        # adjacency is unused by the reference forward pass as well.
        del adjacency
        n_nodes, n_node_feat = nodes.shape
        n_edges, n_edge_feat = edges.shape
        inc_bf = incidence.astype(jnp.bfloat16)   # 0/1 mask: exact in bf16
        input_bytes = (nodes.size * 4 + edges.size * 4 + inc_bf.size * 2
                       + wslab.size * 2 + bslab.size * 4)
        out = pl.pallas_call(
            kern,
            out_shape=jax.ShapeDtypeStruct((n_edges, out_pad), jnp.float32),
            in_specs=[_VMEM_SPEC] * 5,
            out_specs=_VMEM_SPEC,
            compiler_params=pltpu.CompilerParams(vmem_limit_bytes=vmem_limit),
            cost_estimate=_cost_estimate(n_nodes, n_edges, n_node_feat,
                                         n_edge_feat, hidden, out_pad,
                                         n_blocks, input_bytes),
        )(nodes, edges, inc_bf, wslab, bslab)
        # Lane-dense [n_edges, out_pad] store in-kernel; slice back to out_size.
        return out[:, :out_size]

    return forward


# ---------------------------------------------------------------------------
# Pure-JAX reference (same bf16-MXU / f32-accumulate precision policy)
# ---------------------------------------------------------------------------
def reference_forward(params, nodes, edges, incidence):
    hidden = params["node_w2"].shape[1]
    inv = 1.0 / math.sqrt(hidden)

    def mm(a, w):
        return jnp.dot(a.astype(jnp.bfloat16), w.astype(jnp.bfloat16),
                       preferred_element_type=jnp.float32)

    def ln(z, w, b):
        mu = jnp.mean(z, axis=-1, keepdims=True)
        var = jnp.mean((z - mu) ** 2, axis=-1, keepdims=True)
        return (z - mu) * lax.rsqrt(var + _LN_EPS) * w + b

    def attention(x, y, mask, u):
        q = mm(x, u["wq"] * inv)
        k = mm(y, u["wk"])
        v = mm(y, u["wv"])
        s = lax.dot_general(q.astype(jnp.bfloat16), k.astype(jnp.bfloat16),
                            dimension_numbers=(((1,), (1,)), ((), ())),
                            preferred_element_type=jnp.float32)
        m = jnp.max(s, axis=1, keepdims=True)
        ex = jnp.exp(s - m) * mask
        probs = ex / (jnp.sum(ex, axis=1, keepdims=True) + 1e-6)
        x_att = mm(probs, v)
        z = ln(x + x_att, u["ln1_w"], u["ln1_b"])
        ff = mm(jnp.maximum(mm(z, u["wf1"]), 0.0), u["wf2"])
        return ln(z + ff, u["ln2_w"], u["ln2_b"])

    inc = incidence.astype(jnp.float32)
    nodes = mm(jnp.maximum(mm(nodes, params["node_w1"]) + params["node_b1"], 0.0),
               params["node_w2"]) + params["node_b2"]
    edges = mm(jnp.maximum(mm(edges, params["edge_w1"]) + params["edge_b1"], 0.0),
               params["edge_w2"]) + params["edge_b2"]
    for blk in params["blocks"]:
        new_nodes = attention(nodes, edges, inc, blk["e2v"])
        new_edges = attention(edges, nodes, inc.T, blk["v2e"])
        nodes, edges = new_nodes, new_edges
    logits = mm(edges, params["out_w"]) + params["out_b"]
    m = jnp.max(logits, axis=1, keepdims=True)
    e = jnp.exp(logits - m)
    return e / jnp.sum(e, axis=1, keepdims=True)


# ---------------------------------------------------------------------------
# Parameter construction (deterministic, synthetic; raw f32, PyTorch-like)
# Weight matrices are stored pre-transposed to [in_features, out_features].
# ---------------------------------------------------------------------------
def _mat(key, shape, scale=0.1):
    return (scale * jax.random.normal(key, shape)).astype(jnp.float32)


def init_attention_params(key, hidden):
    ks = jax.random.split(key, 9)
    return {
        "wq": _mat(ks[0], (hidden, hidden)),
        "wk": _mat(ks[1], (hidden, hidden)),
        "wv": _mat(ks[2], (hidden, hidden)),
        "wf1": _mat(ks[3], (hidden, hidden)),
        "wf2": _mat(ks[4], (hidden, hidden)),
        "ln1_w": _mat(ks[5], (1, hidden)) + 1.0,
        "ln1_b": _mat(ks[6], (1, hidden)),
        "ln2_w": _mat(ks[7], (1, hidden)) + 1.0,
        "ln2_b": _mat(ks[8], (1, hidden)),
    }


def init_graph_attention_params(key, n_node_feat, n_edge_feat, hidden, out_size,
                                n_blocks):
    ks = jax.random.split(key, 10 + n_blocks)
    params = {
        "node_w1": _mat(ks[0], (n_node_feat, hidden)),
        "node_b1": _mat(ks[1], (1, hidden)),
        "node_w2": _mat(ks[2], (hidden, hidden)),
        "node_b2": _mat(ks[3], (1, hidden)),
        "edge_w1": _mat(ks[4], (n_edge_feat, hidden)),
        "edge_b1": _mat(ks[5], (1, hidden)),
        "edge_w2": _mat(ks[6], (hidden, hidden)),
        "edge_b2": _mat(ks[7], (1, hidden)),
        "out_w": _mat(ks[8], (hidden, out_size)),
        "out_b": _mat(ks[9], (1, out_size)),
        "blocks": [],
    }
    for i in range(n_blocks):
        bk = jax.random.split(ks[10 + i], 2)
        params["blocks"].append({
            "e2v": init_attention_params(bk[0], hidden),
            "v2e": init_attention_params(bk[1], hidden),
        })
    return params


if __name__ == "__main__":
    # small deterministic problem
    N_NODES, N_EDGES = 8, 16
    N_NODE_FEAT, N_EDGE_FEAT = 6, 10
    HIDDEN, OUT_SIZE, N_BLOCKS = 32, 4, 2

    key = jax.random.PRNGKey(0)
    k_nodes, k_edges, k_adj, k_inc, k_params = jax.random.split(key, 5)

    nodes = jax.random.normal(k_nodes, (N_NODES, N_NODE_FEAT), dtype=jnp.float32)
    edges = jax.random.normal(k_edges, (N_EDGES, N_EDGE_FEAT), dtype=jnp.float32)
    adjacency = (jax.random.uniform(k_adj, (N_NODES, N_NODES)) < 0.5).astype(jnp.float32)
    incidence = (jax.random.uniform(k_inc, (N_NODES, N_EDGES)) < 0.5).astype(jnp.float32)

    params = init_graph_attention_params(
        k_params, N_NODE_FEAT, N_EDGE_FEAT, HIDDEN, OUT_SIZE, N_BLOCKS)

    wslab, bslab, meta = pack_graph_attention_params(params)
    forward = build_graph_attention_forward(meta)

    out = forward(wslab, bslab, nodes, edges, adjacency, incidence)
    out = jax.block_until_ready(out)
    assert out.shape == (N_EDGES, OUT_SIZE)
    assert bool(jnp.all(jnp.isfinite(out)))

    # Tolerance-asserted pure-JAX reference (same precision policy as the kernel).
    ref = jax.block_until_ready(reference_forward(params, nodes, edges, incidence))
    max_err = float(jnp.max(jnp.abs(out - ref)))
    assert max_err < 5e-3, f"kernel vs reference mismatch: max abs err {max_err}"

    print("KERNEL_OK")
</pallas_src>

<mosaic_0001>
module attributes {stable_mosaic.version = 11 : i64} {
  func.func @_fused_forward_kernel(%arg0: memref<8x6xf32, #tpu.memory_space<vmem>>, %arg1: memref<16x10xf32, #tpu.memory_space<vmem>>, %arg2: memref<8x16xbf16, #tpu.memory_space<vmem>>, %arg3: memref<504x128xbf16, #tpu.memory_space<vmem>>, %arg4: memref<168x128xf32, #tpu.memory_space<vmem>>, %arg5: memref<16x128xf32, #tpu.memory_space<vmem>>) attributes {dimension_semantics = [], scalar_prefetch = 0 : i64, scratch_operands = 0 : i64, tpu.core_type = #tpu.core_type<tc>} {
    %c0 = arith.constant 0 : index
    %c0_0 = arith.constant 0 : index
    %0 = vector.load %arg2[%c0, %c0_0] : memref<8x16xbf16, #tpu.memory_space<vmem>>, vector<8x16xbf16>
    %1 = arith.extf %0 : vector<8x16xbf16> to vector<8x16xf32>
    %2 = tpu.iota {dimensions = array<i32: 0>} : vector<16x16xi32>
    %3 = tpu.iota {dimensions = array<i32: 1>} : vector<16x16xi32>
    %4 = arith.cmpi eq, %2, %3 : vector<16x16xi32>
    %cst = arith.constant 1.000000e+00 : f32
    %cst_1 = arith.constant 0.000000e+00 : f32
    %5 = vector.broadcast %cst : f32 to vector<16x16xf32>
    %6 = vector.broadcast %cst_1 : f32 to vector<16x16xf32>
    %7 = arith.select %4, %5, %6 : vector<16x16xi1>, vector<16x16xf32>
    %8 = arith.truncf %7 : vector<16x16xf32> to vector<16x16xbf16>
    %cst_2 = arith.constant dense<0.000000e+00> : vector<16x8xf32>
    %9 = tpu.matmul %8, %0, %cst_2 {dimension_numbers = #tpu.dot_dimension_numbers<[1], [1], [0], [0], [0, 0, 1, 0], [], []>} : vector<16x16xbf16>, vector<8x16xbf16>, vector<16x8xf32> -> vector<16x8xf32>
    %c0_3 = arith.constant 0 : index
    %c0_4 = arith.constant 0 : index
    %10 = vector.load %arg0[%c0_3, %c0_4] : memref<8x6xf32, #tpu.memory_space<vmem>>, vector<8x6xf32>
    %c0_5 = arith.constant 0 : index
    %c0_6 = arith.constant 0 : index
    %11 = vector.load %arg3[%c0_5, %c0_6] : memref<504x128xbf16, #tpu.memory_space<vmem>>, vector<6x32xbf16>
    %12 = arith.truncf %10 : vector<8x6xf32> to vector<8x6xbf16>
    %cst_7 = arith.constant dense<0.000000e+00> : vector<8x32xf32>
    %13 = tpu.matmul %12, %11, %cst_7 {dimension_numbers = #tpu.dot_dimension_numbers<[1], [0], [0], [1], [0, 0, 1, 1], [], []>} : vector<8x6xbf16>, vector<6x32xbf16>, vector<8x32xf32> -> vector<8x32xf32>
    %c0_8 = arith.constant 0 : index
    %c0_9 = arith.constant 0 : index
    %14 = vector.load %arg4[%c0_8, %c0_9] : memref<168x128xf32, #tpu.memory_space<vmem>>, vector<1x32xf32>
    %15 = vector.broadcast %14 : vector<1x32xf32> to vector<8x32xf32>
    %16 = arith.addf %13, %15 : vector<8x32xf32>
    %cst_10 = arith.constant 0.000000e+00 : f32
    %17 = vector.broadcast %cst_10 : f32 to vector<8x32xf32>
    %18 = arith.maximumf %16, %17 : vector<8x32xf32>
    %c8 = arith.constant 8 : index
    %c0_11 = arith.constant 0 : index
    %19 = vector.load %arg3[%c8, %c0_11] : memref<504x128xbf16, #tpu.memory_space<vmem>>, vector<32x32xbf16>
    %20 = arith.truncf %18 : vector<8x32xf32> to vector<8x32xbf16>
    %cst_12 = arith.constant dense<0.000000e+00> : vector<8x32xf32>
    %21 = tpu.matmul %20, %19, %cst_12 {dimension_numbers = #tpu.dot_dimension_numbers<[1], [0], [0], [1], [0, 0, 1, 1], [], []>} : vector<8x32xbf16>, vector<32x32xbf16>, vector<8x32xf32> -> vector<8x32xf32>
    %c8_13 = arith.constant 8 : index
    %c0_14 = arith.constant 0 : index
    %22 = vector.load %arg4[%c8_13, %c0_14] : memref<168x128xf32, #tpu.memory_space<vmem>>, vector<1x32xf32>
    %23 = vector.broadcast %22 : vector<1x32xf32> to vector<8x32xf32>
    %24 = arith.addf %21, %23 : vector<8x32xf32>
    %c0_15 = arith.constant 0 : index
    %c0_16 = arith.constant 0 : index
    %25 = vector.load %arg1[%c0_15, %c0_16] : memref<16x10xf32, #tpu.memory_space<vmem>>, vector<16x10xf32>
    %c40 = arith.constant 40 : index
    %c0_17 = arith.constant 0 : index
    %26 = vector.load %arg3[%c40, %c0_17] : memref<504x128xbf16, #tpu.memory_space<vmem>>, vector<10x32xbf16>
    %27 = arith.truncf %25 : vector<16x10xf32> to vector<16x10xbf16>
    %cst_18 = arith.constant dense<0.000000e+00> : vector<16x32xf32>
    %28 = tpu.matmul %27, %26, %cst_18 {dimension_numbers = #tpu.dot_dimension_numbers<[1], [0], [0], [1], [0, 0, 1, 1], [], []>} : vector<16x10xbf16>, vector<10x32xbf16>, vector<16x32xf32> -> vector<16x32xf32>
    %c16 = arith.constant 16 : index
    %c0_19 = arith.constant 0 : index
    %29 = vector.load %arg4[%c16, %c0_19] : memref<168x128xf32, #tpu.memory_space<vmem>>, vector<1x32xf32>
    %30 = vector.broadcast %29 : vector<1x32xf32> to vector<16x32xf32>
    %31 = arith.addf %28, %30 : vector<16x32xf32>
    %cst_20 = arith.constant 0.000000e+00 : f32
    %32 = vector.broadcast %cst_20 : f32 to vector<16x32xf32>
    %33 = arith.maximumf %31, %32 : vector<16x32xf32>
    %c56 = arith.constant 56 : index
    %c0_21 = arith.constant 0 : index
    %34 = vector.load %arg3[%c56, %c0_21] : memref<504x128xbf16, #tpu.memory_space<vmem>>, vector<32x32xbf16>
    %35 = arith.truncf %33 : vector<16x32xf32> to vector<16x32xbf16>
    %cst_22 = arith.constant dense<0.000000e+00> : vector<16x32xf32>
    %36 = tpu.matmul %35, %34, %cst_22 {dimension_numbers = #tpu.dot_dimension_numbers<[1], [0], [0], [1], [0, 0, 1, 1], [], []>} : vector<16x32xbf16>, vector<32x32xbf16>, vector<16x32xf32> -> vector<16x32xf32>
    %c24 = arith.constant 24 : index
    %c0_23 = arith.constant 0 : index
    %37 = vector.load %arg4[%c24, %c0_23] : memref<168x128xf32, #tpu.memory_space<vmem>>, vector<1x32xf32>
    %38 = vector.broadcast %37 : vector<1x32xf32> to vector<16x32xf32>
    %39 = arith.addf %36, %38 : vector<16x32xf32>
    %c88 = arith.constant 88 : index
    %c0_24 = arith.constant 0 : index
    %40 = vector.load %arg3[%c88, %c0_24] : memref<504x128xbf16, #tpu.memory_space<vmem>>, vector<32x96xbf16>
    %41 = arith.truncf %24 : vector<8x32xf32> to vector<8x32xbf16>
    %cst_25 = arith.constant dense<0.000000e+00> : vector<8x96xf32>
    %42 = tpu.matmul %41, %40, %cst_25 {dimension_numbers = #tpu.dot_dimension_numbers<[1], [0], [0], [1], [0, 0, 1, 1], [], []>} : vector<8x32xbf16>, vector<32x96xbf16>, vector<8x96xf32> -> vector<8x96xf32>
    %c120 = arith.constant 120 : index
    %c0_26 = arith.constant 0 : index
    %43 = vector.load %arg3[%c120, %c0_26] : memref<504x128xbf16, #tpu.memory_space<vmem>>, vector<32x96xbf16>
    %44 = arith.truncf %39 : vector<16x32xf32> to vector<16x32xbf16>
    %cst_27 = arith.constant dense<0.000000e+00> : vector<16x96xf32>
    %45 = tpu.matmul %44, %43, %cst_27 {dimension_numbers = #tpu.dot_dimension_numbers<[1], [0], [0], [1], [0, 0, 1, 1], [], []>} : vector<16x32xbf16>, vector<32x96xbf16>, vector<16x96xf32> -> vector<16x96xf32>
    %46 = vector.extract_strided_slice %42 {offsets = [0, 0], sizes = [8, 32], strides = [1, 1]} : vector<8x96xf32> to vector<8x32xf32>
    %47 = vector.extract_strided_slice %45 {offsets = [0, 32], sizes = [16, 32], strides = [1, 1]} : vector<16x96xf32> to vector<16x32xf32>
    %48 = vector.extract_strided_slice %45 {offsets = [0, 64], sizes = [16, 32], strides = [1, 1]} : vector<16x96xf32> to vector<16x32xf32>
    %c152 = arith.constant 152 : index
    %c0_28 = arith.constant 0 : index
    %49 = vector.load %arg3[%c152, %c0_28] : memref<504x128xbf16, #tpu.memory_space<vmem>>, vector<32x32xbf16>
    %c184 = arith.constant 184 : index
    %c0_29 = arith.constant 0 : index
    %50 = vector.load %arg3[%c184, %c0_29] : memref<504x128xbf16, #tpu.memory_space<vmem>>, vector<32x32xbf16>
    %c32 = arith.constant 32 : index
    %c0_30 = arith.constant 0 : index
    %51 = vector.load %arg4[%c32, %c0_30] : memref<168x128xf32, #tpu.memory_space<vmem>>, vector<1x32xf32>
    %c40_31 = arith.constant 40 : index
    %c0_32 = arith.constant 0 : index
    %52 = vector.load %arg4[%c40_31, %c0_32] : memref<168x128xf32, #tpu.memory_space<vmem>>, vector<1x32xf32>
    %c48 = arith.constant 48 : index
    %c0_33 = arith.constant 0 : index
    %53 = vector.load %arg4[%c48, %c0_33] : memref<168x128xf32, #tpu.memory_space<vmem>>, vector<1x32xf32>
    %c56_34 = arith.constant 56 : index
    %c0_35 = arith.constant 0 : index
    %54 = vector.load %arg4[%c56_34, %c0_35] : memref<168x128xf32, #tpu.memory_space<vmem>>, vector<1x32xf32>
    %55 = arith.truncf %46 : vector<8x32xf32> to vector<8x32xbf16>
    %56 = arith.truncf %47 : vector<16x32xf32> to vector<16x32xbf16>
    %cst_36 = arith.constant dense<0.000000e+00> : vector<8x16xf32>
    %57 = tpu.matmul %55, %56, %cst_36 {dimension_numbers = #tpu.dot_dimension_numbers<[1], [1], [0], [0], [0, 0, 1, 0], [], []>} : vector<8x32xbf16>, vector<16x32xbf16>, vector<8x16xf32> -> vector<8x16xf32>
    %cst_37 = arith.constant dense<0xFF800000> : vector<8xf32>
    %58 = vector.multi_reduction <maximumf>, %57, %cst_37 [1] : vector<8x16xf32> to vector<8xf32>
    %59 = vector.shape_cast %58 : vector<8xf32> to vector<8x1xf32>
    %60 = vector.broadcast %59 : vector<8x1xf32> to vector<8x16xf32>
    %61 = arith.subf %57, %60 : vector<8x16xf32>
    %62 = math.exp %61 : vector<8x16xf32>
    %63 = arith.mulf %62, %1 : vector<8x16xf32>
    %cst_38 = arith.constant dense<0.000000e+00> : vector<8xf32>
    %64 = vector.multi_reduction <add>, %63, %cst_38 [1] : vector<8x16xf32> to vector<8xf32>
    %65 = vector.shape_cast %64 : vector<8xf32> to vector<8x1xf32>
    %cst_39 = arith.constant 9.99999997E-7 : f32
    %66 = vector.broadcast %cst_39 : f32 to vector<8x1xf32>
    %67 = arith.addf %65, %66 : vector<8x1xf32>
    %68 = vector.broadcast %67 : vector<8x1xf32> to vector<8x16xf32>
    %69 = arith.divf %63, %68 : vector<8x16xf32>
    %70 = arith.truncf %69 : vector<8x16xf32> to vector<8x16xbf16>
    %71 = arith.truncf %48 : vector<16x32xf32> to vector<16x32xbf16>
    %cst_40 = arith.constant dense<0.000000e+00> : vector<8x32xf32>
    %72 = tpu.matmul %70, %71, %cst_40 {dimension_numbers = #tpu.dot_dimension_numbers<[1], [0], [0], [1], [0, 0, 1, 1], [], []>} : vector<8x16xbf16>, vector<16x32xbf16>, vector<8x32xf32> -> vector<8x32xf32>
    %73 = arith.addf %24, %72 : vector<8x32xf32>
    %cst_41 = arith.constant dense<0.000000e+00> : vector<8xf32>
    %74 = vector.multi_reduction <add>, %73, %cst_41 [1] : vector<8x32xf32> to vector<8xf32>
    %75 = vector.shape_cast %74 : vector<8xf32> to vector<8x1xf32>
    %cst_42 = arith.constant 3.200000e+01 : f32
    %76 = vector.broadcast %cst_42 : f32 to vector<8x1xf32>
    %77 = arith.divf %75, %76 : vector<8x1xf32>
    %78 = vector.broadcast %77 : vector<8x1xf32> to vector<8x32xf32>
    %79 = arith.subf %73, %78 : vector<8x32xf32>
    %80 = arith.mulf %79, %79 : vector<8x32xf32>
    %cst_43 = arith.constant dense<0.000000e+00> : vector<8xf32>
    %81 = vector.multi_reduction <add>, %80, %cst_43 [1] : vector<8x32xf32> to vector<8xf32>
    %82 = vector.shape_cast %81 : vector<8xf32> to vector<8x1xf32>
    %cst_44 = arith.constant 3.200000e+01 : f32
    %83 = vector.broadcast %cst_44 : f32 to vector<8x1xf32>
    %84 = arith.divf %82, %83 : vector<8x1xf32>
    %85 = vector.broadcast %77 : vector<8x1xf32> to vector<8x32xf32>
    %86 = arith.subf %73, %85 : vector<8x32xf32>
    %cst_45 = arith.constant 9.99999974E-6 : f32
    %87 = vector.broadcast %cst_45 : f32 to vector<8x1xf32>
    %88 = arith.addf %84, %87 : vector<8x1xf32>
    %89 = math.rsqrt %88 : vector<8x1xf32>
    %90 = vector.broadcast %89 : vector<8x1xf32> to vector<8x32xf32>
    %91 = arith.mulf %86, %90 : vector<8x32xf32>
    %92 = vector.broadcast %51 : vector<1x32xf32> to vector<8x32xf32>
    %93 = arith.mulf %91, %92 : vector<8x32xf32>
    %94 = vector.broadcast %52 : vector<1x32xf32> to vector<8x32xf32>
    %95 = arith.addf %93, %94 : vector<8x32xf32>
    %96 = arith.truncf %95 : vector<8x32xf32> to vector<8x32xbf16>
    %cst_46 = arith.constant dense<0.000000e+00> : vector<8x32xf32>
    %97 = tpu.matmul %96, %49, %cst_46 {dimension_numbers = #tpu.dot_dimension_numbers<[1], [0], [0], [1], [0, 0, 1, 1], [], []>} : vector<8x32xbf16>, vector<32x32xbf16>, vector<8x32xf32> -> vector<8x32xf32>
    %cst_47 = arith.constant 0.000000e+00 : f32
    %98 = vector.broadcast %cst_47 : f32 to vector<8x32xf32>
    %99 = arith.maximumf %97, %98 : vector<8x32xf32>
    %100 = arith.truncf %99 : vector<8x32xf32> to vector<8x32xbf16>
    %cst_48 = arith.constant dense<0.000000e+00> : vector<8x32xf32>
    %101 = tpu.matmul %100, %50, %cst_48 {dimension_numbers = #tpu.dot_dimension_numbers<[1], [0], [0], [1], [0, 0, 1, 1], [], []>} : vector<8x32xbf16>, vector<32x32xbf16>, vector<8x32xf32> -> vector<8x32xf32>
    %102 = arith.addf %95, %101 : vector<8x32xf32>
    %cst_49 = arith.constant dense<0.000000e+00> : vector<8xf32>
    %103 = vector.multi_reduction <add>, %102, %cst_49 [1] : vector<8x32xf32> to vector<8xf32>
    %104 = vector.shape_cast %103 : vector<8xf32> to vector<8x1xf32>
    %cst_50 = arith.constant 3.200000e+01 : f32
    %105 = vector.broadcast %cst_50 : f32 to vector<8x1xf32>
    %106 = arith.divf %104, %105 : vector<8x1xf32>
    %107 = vector.broadcast %106 : vector<8x1xf32> to vector<8x32xf32>
    %108 = arith.subf %102, %107 : vector<8x32xf32>
    %109 = arith.mulf %108, %108 : vector<8x32xf32>
    %cst_51 = arith.constant dense<0.000000e+00> : vector<8xf32>
    %110 = vector.multi_reduction <add>, %109, %cst_51 [1] : vector<8x32xf32> to vector<8xf32>
    %111 = vector.shape_cast %110 : vector<8xf32> to vector<8x1xf32>
    %cst_52 = arith.constant 3.200000e+01 : f32
    %112 = vector.broadcast %cst_52 : f32 to vector<8x1xf32>
    %113 = arith.divf %111, %112 : vector<8x1xf32>
    %114 = vector.broadcast %106 : vector<8x1xf32> to vector<8x32xf32>
    %115 = arith.subf %102, %114 : vector<8x32xf32>
    %cst_53 = arith.constant 9.99999974E-6 : f32
    %116 = vector.broadcast %cst_53 : f32 to vector<8x1xf32>
    %117 = arith.addf %113, %116 : vector<8x1xf32>
    %118 = math.rsqrt %117 : vector<8x1xf32>
    %119 = vector.broadcast %118 : vector<8x1xf32> to vector<8x32xf32>
    %120 = arith.mulf %115, %119 : vector<8x32xf32>
    %121 = vector.broadcast %53 : vector<1x32xf32> to vector<8x32xf32>
    %122 = arith.mulf %120, %121 : vector<8x32xf32>
    %123 = vector.broadcast %54 : vector<1x32xf32> to vector<8x32xf32>
    %124 = arith.addf %122, %123 : vector<8x32xf32>
    %125 = vector.extract_strided_slice %45 {offsets = [0, 0], sizes = [16, 32], strides = [1, 1]} : vector<16x96xf32> to vector<16x32xf32>
    %126 = vector.extract_strided_slice %42 {offsets = [0, 32], sizes = [8, 32], strides = [1, 1]} : vector<8x96xf32> to vector<8x32xf32>
    %127 = vector.extract_strided_slice %42 {offsets = [0, 64], sizes = [8, 32], strides = [1, 1]} : vector<8x96xf32> to vector<8x32xf32>
    %c216 = arith.constant 216 : index
    %c0_54 = arith.constant 0 : index
    %128 = vector.load %arg3[%c216, %c0_54] : memref<504x128xbf16, #tpu.memory_space<vmem>>, vector<32x32xbf16>
    %c248 = arith.constant 248 : index
    %c0_55 = arith.constant 0 : index
    %129 = vector.load %arg3[%c248, %c0_55] : memref<504x128xbf16, #tpu.memory_space<vmem>>, vector<32x32xbf16>
    %c64 = arith.constant 64 : index
    %c0_56 = arith.constant 0 : index
    %130 = vector.load %arg4[%c64, %c0_56] : memref<168x128xf32, #tpu.memory_space<vmem>>, vector<1x32xf32>
    %c72 = arith.constant 72 : index
    %c0_57 = arith.constant 0 : index
    %131 = vector.load %arg4[%c72, %c0_57] : memref<168x128xf32, #tpu.memory_space<vmem>>, vector<1x32xf32>
    %c80 = arith.constant 80 : index
    %c0_58 = arith.constant 0 : index
    %132 = vector.load %arg4[%c80, %c0_58] : memref<168x128xf32, #tpu.memory_space<vmem>>, vector<1x32xf32>
    %c88_59 = arith.constant 88 : index
    %c0_60 = arith.constant 0 : index
    %133 = vector.load %arg4[%c88_59, %c0_60] : memref<168x128xf32, #tpu.memory_space<vmem>>, vector<1x32xf32>
    %134 = arith.truncf %125 : vector<16x32xf32> to vector<16x32xbf16>
    %135 = arith.truncf %126 : vector<8x32xf32> to vector<8x32xbf16>
    %cst_61 = arith.constant dense<0.000000e+00> : vector<16x8xf32>
    %136 = tpu.matmul %134, %135, %cst_61 {dimension_numbers = #tpu.dot_dimension_numbers<[1], [1], [0], [0], [0, 0, 1, 0], [], []>} : vector<16x32xbf16>, vector<8x32xbf16>, vector<16x8xf32> -> vector<16x8xf32>
    %cst_62 = arith.constant dense<0xFF800000> : vector<16xf32>
    %137 = vector.multi_reduction <maximumf>, %136, %cst_62 [1] : vector<16x8xf32> to vector<16xf32>
    %138 = vector.shape_cast %137 : vector<16xf32> to vector<16x1xf32>
    %139 = vector.broadcast %138 : vector<16x1xf32> to vector<16x8xf32>
    %140 = arith.subf %136, %139 : vector<16x8xf32>
    %141 = math.exp %140 : vector<16x8xf32>
    %142 = arith.mulf %141, %9 : vector<16x8xf32>
    %cst_63 = arith.constant dense<0.000000e+00> : vector<16xf32>
    %143 = vector.multi_reduction <add>, %142, %cst_63 [1] : vector<16x8xf32> to vector<16xf32>
    %144 = vector.shape_cast %143 : vector<16xf32> to vector<16x1xf32>
    %cst_64 = arith.constant 9.99999997E-7 : f32
    %145 = vector.broadcast %cst_64 : f32 to vector<16x1xf32>
    %146 = arith.addf %144, %145 : vector<16x1xf32>
    %147 = vector.broadcast %146 : vector<16x1xf32> to vector<16x8xf32>
    %148 = arith.divf %142, %147 : vector<16x8xf32>
    %149 = arith.truncf %148 : vector<16x8xf32> to vector<16x8xbf16>
    %150 = arith.truncf %127 : vector<8x32xf32> to vector<8x32xbf16>
    %cst_65 = arith.constant dense<0.000000e+00> : vector<16x32xf32>
    %151 = tpu.matmul %149, %150, %cst_65 {dimension_numbers = #tpu.dot_dimension_numbers<[1], [0], [0], [1], [0, 0, 1, 1], [], []>} : vector<16x8xbf16>, vector<8x32xbf16>, vector<16x32xf32> -> vector<16x32xf32>
    %152 = arith.addf %39, %151 : vector<16x32xf32>
    %cst_66 = arith.constant dense<0.000000e+00> : vector<16xf32>
    %153 = vector.multi_reduction <add>, %152, %cst_66 [1] : vector<16x32xf32> to vector<16xf32>
    %154 = vector.shape_cast %153 : vector<16xf32> to vector<16x1xf32>
    %cst_67 = arith.constant 3.200000e+01 : f32
    %155 = vector.broadcast %cst_67 : f32 to vector<16x1xf32>
    %156 = arith.divf %154, %155 : vector<16x1xf32>
    %157 = vector.broadcast %156 : vector<16x1xf32> to vector<16x32xf32>
    %158 = arith.subf %152, %157 : vector<16x32xf32>
    %159 = arith.mulf %158, %158 : vector<16x32xf32>
    %cst_68 = arith.constant dense<0.000000e+00> : vector<16xf32>
    %160 = vector.multi_reduction <add>, %159, %cst_68 [1] : vector<16x32xf32> to vector<16xf32>
    %161 = vector.shape_cast %160 : vector<16xf32> to vector<16x1xf32>
    %cst_69 = arith.constant 3.200000e+01 : f32
    %162 = vector.broadcast %cst_69 : f32 to vector<16x1xf32>
    %163 = arith.divf %161, %162 : vector<16x1xf32>
    %164 = vector.broadcast %156 : vector<16x1xf32> to vector<16x32xf32>
    %165 = arith.subf %152, %164 : vector<16x32xf32>
    %cst_70 = arith.constant 9.99999974E-6 : f32
    %166 = vector.broadcast %cst_70 : f32 to vector<16x1xf32>
    %167 = arith.addf %163, %166 : vector<16x1xf32>
    %168 = math.rsqrt %167 : vector<16x1xf32>
    %169 = vector.broadcast %168 : vector<16x1xf32> to vector<16x32xf32>
    %170 = arith.mulf %165, %169 : vector<16x32xf32>
    %171 = vector.broadcast %130 : vector<1x32xf32> to vector<16x32xf32>
    %172 = arith.mulf %170, %171 : vector<16x32xf32>
    %173 = vector.broadcast %131 : vector<1x32xf32> to vector<16x32xf32>
    %174 = arith.addf %172, %173 : vector<16x32xf32>
    %175 = arith.truncf %174 : vector<16x32xf32> to vector<16x32xbf16>
    %cst_71 = arith.constant dense<0.000000e+00> : vector<16x32xf32>
    %176 = tpu.matmul %175, %128, %cst_71 {dimension_numbers = #tpu.dot_dimension_numbers<[1], [0], [0], [1], [0, 0, 1, 1], [], []>} : vector<16x32xbf16>, vector<32x32xbf16>, vector<16x32xf32> -> vector<16x32xf32>
    %cst_72 = arith.constant 0.000000e+00 : f32
    %177 = vector.broadcast %cst_72 : f32 to vector<16x32xf32>
    %178 = arith.maximumf %176, %177 : vector<16x32xf32>
    %179 = arith.truncf %178 : vector<16x32xf32> to vector<16x32xbf16>
    %cst_73 = arith.constant dense<0.000000e+00> : vector<16x32xf32>
    %180 = tpu.matmul %179, %129, %cst_73 {dimension_numbers = #tpu.dot_dimension_numbers<[1], [0], [0], [1], [0, 0, 1, 1], [], []>} : vector<16x32xbf16>, vector<32x32xbf16>, vector<16x32xf32> -> vector<16x32xf32>
    %181 = arith.addf %174, %180 : vector<16x32xf32>
    %cst_74 = arith.constant dense<0.000000e+00> : vector<16xf32>
    %182 = vector.multi_reduction <add>, %181, %cst_74 [1] : vector<16x32xf32> to vector<16xf32>
    %183 = vector.shape_cast %182 : vector<16xf32> to vector<16x1xf32>
    %cst_75 = arith.constant 3.200000e+01 : f32
    %184 = vector.broadcast %cst_75 : f32 to vector<16x1xf32>
    %185 = arith.divf %183, %184 : vector<16x1xf32>
    %186 = vector.broadcast %185 : vector<16x1xf32> to vector<16x32xf32>
    %187 = arith.subf %181, %186 : vector<16x32xf32>
    %188 = arith.mulf %187, %187 : vector<16x32xf32>
    %cst_76 = arith.constant dense<0.000000e+00> : vector<16xf32>
    %189 = vector.multi_reduction <add>, %188, %cst_76 [1] : vector<16x32xf32> to vector<16xf32>
    %190 = vector.shape_cast %189 : vector<16xf32> to vector<16x1xf32>
    %cst_77 = arith.constant 3.200000e+01 : f32
    %191 = vector.broadcast %cst_77 : f32 to vector<16x1xf32>
    %192 = arith.divf %190, %191 : vector<16x1xf32>
    %193 = vector.broadcast %185 : vector<16x1xf32> to vector<16x32xf32>
    %194 = arith.subf %181, %193 : vector<16x32xf32>
    %cst_78 = arith.constant 9.99999974E-6 : f32
    %195 = vector.broadcast %cst_78 : f32 to vector<16x1xf32>
    %196 = arith.addf %192, %195 : vector<16x1xf32>
    %197 = math.rsqrt %196 : vector<16x1xf32>
    %198 = vector.broadcast %197 : vector<16x1xf32> to vector<16x32xf32>
    %199 = arith.mulf %194, %198 : vector<16x32xf32>
    %200 = vector.broadcast %132 : vector<1x32xf32> to vector<16x32xf32>
    %201 = arith.mulf %199, %200 : vector<16x32xf32>
    %202 = vector.broadcast %133 : vector<1x32xf32> to vector<16x32xf32>
    %203 = arith.addf %201, %202 : vector<16x32xf32>
    %c280 = arith.constant 280 : index
    %c0_79 = arith.constant 0 : index
    %204 = vector.load %arg3[%c280, %c0_79] : memref<504x128xbf16, #tpu.memory_space<vmem>>, vector<32x96xbf16>
    %205 = arith.truncf %124 : vector<8x32xf32> to vector<8x32xbf16>
    %cst_80 = arith.constant dense<0.000000e+00> : vector<8x96xf32>
    %206 = tpu.matmul %205, %204, %cst_80 {dimension_numbers = #tpu.dot_dimension_numbers<[1], [0], [0], [1], [0, 0, 1, 1], [], []>} : vector<8x32xbf16>, vector<32x96xbf16>, vector<8x96xf32> -> vector<8x96xf32>
    %c312 = arith.constant 312 : index
    %c0_81 = arith.constant 0 : index
    %207 = vector.load %arg3[%c312, %c0_81] : memref<504x128xbf16, #tpu.memory_space<vmem>>, vector<32x96xbf16>
    %208 = arith.truncf %203 : vector<16x32xf32> to vector<16x32xbf16>
    %cst_82 = arith.constant dense<0.000000e+00> : vector<16x96xf32>
    %209 = tpu.matmul %208, %207, %cst_82 {dimension_numbers = #tpu.dot_dimension_numbers<[1], [0], [0], [1], [0, 0, 1, 1], [], []>} : vector<16x32xbf16>, vector<32x96xbf16>, vector<16x96xf32> -> vector<16x96xf32>
    %210 = vector.extract_strided_slice %209 {offsets = [0, 0], sizes = [16, 32], strides = [1, 1]} : vector<16x96xf32> to vector<16x32xf32>
    %211 = vector.extract_strided_slice %206 {offsets = [0, 32], sizes = [8, 32], strides = [1, 1]} : vector<8x96xf32> to vector<8x32xf32>
    %212 = vector.extract_strided_slice %206 {offsets = [0, 64], sizes = [8, 32], strides = [1, 1]} : vector<8x96xf32> to vector<8x32xf32>
    %c408 = arith.constant 408 : index
    %c0_83 = arith.constant 0 : index
    %213 = vector.load %arg3[%c408, %c0_83] : memref<504x128xbf16, #tpu.memory_space<vmem>>, vector<32x32xbf16>
    %c440 = arith.constant 440 : index
    %c0_84 = arith.constant 0 : index
    %214 = vector.load %arg3[%c440, %c0_84] : memref<504x128xbf16, #tpu.memory_space<vmem>>, vector<32x32xbf16>
    %c128 = arith.constant 128 : index
    %c0_85 = arith.constant 0 : index
    %215 = vector.load %arg4[%c128, %c0_85] : memref<168x128xf32, #tpu.memory_space<vmem>>, vector<1x32xf32>
    %c136 = arith.constant 136 : index
    %c0_86 = arith.constant 0 : index
    %216 = vector.load %arg4[%c136, %c0_86] : memref<168x128xf32, #tpu.memory_space<vmem>>, vector<1x32xf32>
    %c144 = arith.constant 144 : index
    %c0_87 = arith.constant 0 : index
    %217 = vector.load %arg4[%c144, %c0_87] : memref<168x128xf32, #tpu.memory_space<vmem>>, vector<1x32xf32>
    %c152_88 = arith.constant 152 : index
    %c0_89 = arith.constant 0 : index
    %218 = vector.load %arg4[%c152_88, %c0_89] : memref<168x128xf32, #tpu.memory_space<vmem>>, vector<1x32xf32>
    %219 = arith.truncf %210 : vector<16x32xf32> to vector<16x32xbf16>
    %220 = arith.truncf %211 : vector<8x32xf32> to vector<8x32xbf16>
    %cst_90 = arith.constant dense<0.000000e+00> : vector<16x8xf32>
    %221 = tpu.matmul %219, %220, %cst_90 {dimension_numbers = #tpu.dot_dimension_numbers<[1], [1], [0], [0], [0, 0, 1, 0], [], []>} : vector<16x32xbf16>, vector<8x32xbf16>, vector<16x8xf32> -> vector<16x8xf32>
    %cst_91 = arith.constant dense<0xFF800000> : vector<16xf32>
    %222 = vector.multi_reduction <maximumf>, %221, %cst_91 [1] : vector<16x8xf32> to vector<16xf32>
    %223 = vector.shape_cast %222 : vector<16xf32> to vector<16x1xf32>
    %224 = vector.broadcast %223 : vector<16x1xf32> to vector<16x8xf32>
    %225 = arith.subf %221, %224 : vector<16x8xf32>
    %226 = math.exp %225 : vector<16x8xf32>
    %227 = arith.mulf %226, %9 : vector<16x8xf32>
    %cst_92 = arith.constant dense<0.000000e+00> : vector<16xf32>
    %228 = vector.multi_reduction <add>, %227, %cst_92 [1] : vector<16x8xf32> to vector<16xf32>
    %229 = vector.shape_cast %228 : vector<16xf32> to vector<16x1xf32>
    %cst_93 = arith.constant 9.99999997E-7 : f32
    %230 = vector.broadcast %cst_93 : f32 to vector<16x1xf32>
    %231 = arith.addf %229, %230 : vector<16x1xf32>
    %232 = vector.broadcast %231 : vector<16x1xf32> to vector<16x8xf32>
    %233 = arith.divf %227, %232 : vector<16x8xf32>
    %234 = arith.truncf %233 : vector<16x8xf32> to vector<16x8xbf16>
    %235 = arith.truncf %212 : vector<8x32xf32> to vector<8x32xbf16>
    %cst_94 = arith.constant dense<0.000000e+00> : vector<16x32xf32>
    %236 = tpu.matmul %234, %235, %cst_94 {dimension_numbers = #tpu.dot_dimension_numbers<[1], [0], [0], [1], [0, 0, 1, 1], [], []>} : vector<16x8xbf16>, vector<8x32xbf16>, vector<16x32xf32> -> vector<16x32xf32>
    %237 = arith.addf %203, %236 : vector<16x32xf32>
    %cst_95 = arith.constant dense<0.000000e+00> : vector<16xf32>
    %238 = vector.multi_reduction <add>, %237, %cst_95 [1] : vector<16x32xf32> to vector<16xf32>
    %239 = vector.shape_cast %238 : vector<16xf32> to vector<16x1xf32>
    %cst_96 = arith.constant 3.200000e+01 : f32
    %240 = vector.broadcast %cst_96 : f32 to vector<16x1xf32>
    %241 = arith.divf %239, %240 : vector<16x1xf32>
    %242 = vector.broadcast %241 : vector<16x1xf32> to vector<16x32xf32>
    %243 = arith.subf %237, %242 : vector<16x32xf32>
    %244 = arith.mulf %243, %243 : vector<16x32xf32>
    %cst_97 = arith.constant dense<0.000000e+00> : vector<16xf32>
    %245 = vector.multi_reduction <add>, %244, %cst_97 [1] : vector<16x32xf32> to vector<16xf32>
    %246 = vector.shape_cast %245 : vector<16xf32> to vector<16x1xf32>
    %cst_98 = arith.constant 3.200000e+01 : f32
    %247 = vector.broadcast %cst_98 : f32 to vector<16x1xf32>
    %248 = arith.divf %246, %247 : vector<16x1xf32>
    %249 = vector.broadcast %241 : vector<16x1xf32> to vector<16x32xf32>
    %250 = arith.subf %237, %249 : vector<16x32xf32>
    %cst_99 = arith.constant 9.99999974E-6 : f32
    %251 = vector.broadcast %cst_99 : f32 to vector<16x1xf32>
    %252 = arith.addf %248, %251 : vector<16x1xf32>
    %253 = math.rsqrt %252 : vector<16x1xf32>
    %254 = vector.broadcast %253 : vector<16x1xf32> to vector<16x32xf32>
    %255 = arith.mulf %250, %254 : vector<16x32xf32>
    %256 = vector.broadcast %215 : vector<1x32xf32> to vector<16x32xf32>
    %257 = arith.mulf %255, %256 : vector<16x32xf32>
    %258 = vector.broadcast %216 : vector<1x32xf32> to vector<16x32xf32>
    %259 = arith.addf %257, %258 : vector<16x32xf32>
    %260 = arith.truncf %259 : vector<16x32xf32> to vector<16x32xbf16>
    %cst_100 = arith.constant dense<0.000000e+00> : vector<16x32xf32>
    %261 = tpu.matmul %260, %213, %cst_100 {dimension_numbers = #tpu.dot_dimension_numbers<[1], [0], [0], [1], [0, 0, 1, 1], [], []>} : vector<16x32xbf16>, vector<32x32xbf16>, vector<16x32xf32> -> vector<16x32xf32>
    %cst_101 = arith.constant 0.000000e+00 : f32
    %262 = vector.broadcast %cst_101 : f32 to vector<16x32xf32>
    %263 = arith.maximumf %261, %262 : vector<16x32xf32>
    %264 = arith.truncf %263 : vector<16x32xf32> to vector<16x32xbf16>
    %cst_102 = arith.constant dense<0.000000e+00> : vector<16x32xf32>
    %265 = tpu.matmul %264, %214, %cst_102 {dimension_numbers = #tpu.dot_dimension_numbers<[1], [0], [0], [1], [0, 0, 1, 1], [], []>} : vector<16x32xbf16>, vector<32x32xbf16>, vector<16x32xf32> -> vector<16x32xf32>
    %266 = arith.addf %259, %265 : vector<16x32xf32>
    %cst_103 = arith.constant dense<0.000000e+00> : vector<16xf32>
    %267 = vector.multi_reduction <add>, %266, %cst_103 [1] : vector<16x32xf32> to vector<16xf32>
    %268 = vector.shape_cast %267 : vector<16xf32> to vector<16x1xf32>
    %cst_104 = arith.constant 3.200000e+01 : f32
    %269 = vector.broadcast %cst_104 : f32 to vector<16x1xf32>
    %270 = arith.divf %268, %269 : vector<16x1xf32>
    %271 = vector.broadcast %270 : vector<16x1xf32> to vector<16x32xf32>
    %272 = arith.subf %266, %271 : vector<16x32xf32>
    %273 = arith.mulf %272, %272 : vector<16x32xf32>
    %cst_105 = arith.constant dense<0.000000e+00> : vector<16xf32>
    %274 = vector.multi_reduction <add>, %273, %cst_105 [1] : vector<16x32xf32> to vector<16xf32>
    %275 = vector.shape_cast %274 : vector<16xf32> to vector<16x1xf32>
    %cst_106 = arith.constant 3.200000e+01 : f32
    %276 = vector.broadcast %cst_106 : f32 to vector<16x1xf32>
    %277 = arith.divf %275, %276 : vector<16x1xf32>
    %278 = vector.broadcast %270 : vector<16x1xf32> to vector<16x32xf32>
    %279 = arith.subf %266, %278 : vector<16x32xf32>
    %cst_107 = arith.constant 9.99999974E-6 : f32
    %280 = vector.broadcast %cst_107 : f32 to vector<16x1xf32>
    %281 = arith.addf %277, %280 : vector<16x1xf32>
    %282 = math.rsqrt %281 : vector<16x1xf32>
    %283 = vector.broadcast %282 : vector<16x1xf32> to vector<16x32xf32>
    %284 = arith.mulf %279, %283 : vector<16x32xf32>
    %285 = vector.broadcast %217 : vector<1x32xf32> to vector<16x32xf32>
    %286 = arith.mulf %284, %285 : vector<16x32xf32>
    %287 = vector.broadcast %218 : vector<1x32xf32> to vector<16x32xf32>
    %288 = arith.addf %286, %287 : vector<16x32xf32>
    %c472 = arith.constant 472 : index
    %c0_108 = arith.constant 0 : index
    %289 = vector.load %arg3[%c472, %c0_108] : memref<504x128xbf16, #tpu.memory_space<vmem>>, vector<32x128xbf16>
    %290 = arith.truncf %288 : vector<16x32xf32> to vector<16x32xbf16>
    %cst_109 = arith.constant dense<0.000000e+00> : vector<16x128xf32>
    %291 = tpu.matmul %290, %289, %cst_109 {dimension_numbers = #tpu.dot_dimension_numbers<[1], [0], [0], [1], [0, 0, 1, 1], [], []>} : vector<16x32xbf16>, vector<32x128xbf16>, vector<16x128xf32> -> vector<16x128xf32>
    %c160 = arith.constant 160 : index
    %c0_110 = arith.constant 0 : index
    %292 = vector.load %arg4[%c160, %c0_110] : memref<168x128xf32, #tpu.memory_space<vmem>>, vector<1x128xf32>
    %293 = vector.broadcast %292 : vector<1x128xf32> to vector<16x128xf32>
    %294 = arith.addf %291, %293 : vector<16x128xf32>
    %cst_111 = arith.constant dense<0xFF800000> : vector<16xf32>
    %295 = vector.multi_reduction <maximumf>, %294, %cst_111 [1] : vector<16x128xf32> to vector<16xf32>
    %296 = vector.shape_cast %295 : vector<16xf32> to vector<16x1xf32>
    %297 = vector.broadcast %296 : vector<16x1xf32> to vector<16x128xf32>
    %298 = arith.subf %294, %297 : vector<16x128xf32>
    %299 = math.exp %298 : vector<16x128xf32>
    %cst_112 = arith.constant dense<0.000000e+00> : vector<16xf32>
    %300 = vector.multi_reduction <add>, %299, %cst_112 [1] : vector<16x128xf32> to vector<16xf32>
    %301 = vector.shape_cast %300 : vector<16xf32> to vector<16x1xf32>
    %302 = vector.broadcast %301 : vector<16x1xf32> to vector<16x128xf32>
    %303 = arith.divf %299, %302 : vector<16x128xf32>
    %c0_113 = arith.constant 0 : index
    %c0_114 = arith.constant 0 : index
    %304 = vector.load %arg5[%c0_113, %c0_114] : memref<16x128xf32, #tpu.memory_space<vmem>>, vector<16x128xf32>
    tpu.vector_store %arg5[%c0_113, %c0_114], %303 {strides = array<i32>} : memref<16x128xf32, #tpu.memory_space<vmem>>, vector<16x128xf32>,
    return
  }
}

</mosaic_0001>

<llo_original>
// kernel: forward.1
$region0: #{forward.1}
  #allocation0 [shape = 'u32[]', space=smem, size = 0x4, offset = 0x4, fixed_abs, tag = 'smem constant byte address 0x4 - core index']
  #allocation1 [shape = 'u32[72,128]{1,0:T(1,128)}', space=vmem, size = 0x9000, scoped, tag = 'internal scratch']
  %s0 = inlined_call_operand.vmem [shape: f32[8,6], index: 0, kind: input, shape index: {}]
  %s1 = inlined_call_operand.hbm [shape: f32[16,10], index: 1, kind: input, shape index: {}]
  %s2 = inlined_call_operand.vmem [shape: bf16[8,16], index: 2, kind: input, shape index: {}]
  %s3 = inlined_call_operand.hbm [shape: bf16[504,128], index: 3, kind: input, shape index: {}]
  %s4 = inlined_call_operand.hbm [shape: f32[168,128], index: 4, kind: input, shape index: {}]
  %s5 = inlined_call_operand.vmem [shape: f32[16,128], index: 5, kind: output, shape index: {}]
  %s6 = sld [smem:[#allocation0]]
  $region42: #{forward.1} parent=0
    _
  %s8 = ssub.s32 1, %s6
  %s9 = scalar_select 0, %s8, %s6
  $region1: #{forward.1} parent=0
    #allocation2 [shape = 'u8[8192]{0}', space=vmem, size = 0x2000, scoped, tag = 'input window, operand 1, single buffered']
    #allocation3 [shape = 's32[1]{0}', space=sflag, size = 0x4, scoped, tag = 'scoped memory for forward.1']
    #allocation4 [shape = 'u8[129024]{0}', space=vmem, size = 0x1f800, scoped, tag = 'input window, operand 3, single buffered']
    #allocation5 [shape = 's32[1]{0}', space=sflag, size = 0x4, scoped, tag = 'scoped memory for forward.1']
    #allocation6 [shape = 'u8[86016]{0}', space=vmem, size = 0x15000, scoped, tag = 'input window, operand 4, single buffered']
    %10 = vsyncpa [#allocation3], 0
    %11 = vsyncpa [#allocation5], 0
    // Predicated region
    $region2: #{forward.1} parent=1 // pred_check
      _
    $region3: #{forward.1} parent=1 // pred_check_branch
      %13 = sbr.rel (0) target = $region5
    $region4: #{forward.1} parent=1 // pred_region
      _
    $region5: #{forward.1} parent=1 // pred_fallthru
      _
    // Predicated region
    $region6: #{forward.1} parent=1 // pred_check
      _
    $region7: #{forward.1} parent=1 // pred_check_branch
      %15 = sbr.rel (0) target = $region9
    $region8: #{forward.1} parent=1 // pred_region
      %17 = vsyncadd [#allocation3], 0
      %s18 = sshll.u32 %s1, 4
      %s19 = int_to_ptr.hbm [resolvable:$true] %s18
      %s20 = sshll.u32 [#allocation2], 4
      %s21 = int_to_ptr.vmem [resolvable:$true] %s20
      %26 = dma.hbm_to_vmem [thread:$0]  %s19, 256, %s21, [#allocation3], 128, 128, 8
    $region9: #{forward.1} parent=1 // pred_fallthru
      _
    // Predicated region
    $region10: #{forward.1} parent=1 // pred_check
      _
    $region11: #{forward.1} parent=1 // pred_check_branch
      %28 = sbr.rel (0) target = $region13
    $region12: #{forward.1} parent=1 // pred_region
      _
    $region13: #{forward.1} parent=1 // pred_fallthru
      _
    // Predicated region
    $region14: #{forward.1} parent=1 // pred_check
      _
    $region15: #{forward.1} parent=1 // pred_check_branch
      %30 = sbr.rel (0) target = $region17
    $region16: #{forward.1} parent=1 // pred_region
      %32 = vsyncadd [#allocation5], 0
      %s33 = sshll.u32 %s3, 4
      %s34 = int_to_ptr.hbm [resolvable:$true] %s33
      %s35 = sshll.u32 [#allocation4], 4
      %s36 = int_to_ptr.vmem [resolvable:$true] %s35
      %41 = dma.hbm_to_vmem [thread:$0]  %s34, 4032, %s36, [#allocation5], 64, 64, 4
    $region17: #{forward.1} parent=1 // pred_fallthru
      _
    // Predicated region
    $region18: #{forward.1} parent=1 // pred_check
      _
    $region19: #{forward.1} parent=1 // pred_check_branch
      %43 = sbr.rel (0) target = $region21
    $region20: #{forward.1} parent=1 // pred_region
      %45 = vsyncadd [#allocation5], 0
      %s46 = sshll.u32 %s4, 4
      %s47 = int_to_ptr.hbm [resolvable:$true] %s46
      %s48 = sshll.u32 [#allocation6], 4
      %s49 = int_to_ptr.vmem [resolvable:$true] %s48
      %54 = dma.hbm_to_vmem [thread:$0]  %s47, 2688, %s49, [#allocation5], 128, 128, 8
    $region21: #{forward.1} parent=1 // pred_fallthru
      _
    // Predicated region
    $region22: #{forward.1} parent=1 // pred_check
      _
    $region23: #{forward.1} parent=1 // pred_check_branch
      %56 = sbr.rel (0) target = $region25
    $region24: #{forward.1} parent=1 // pred_region
      %58 = dma.done [#allocation3], 256
    $region25: #{forward.1} parent=1 // pred_fallthru
      _
    // Predicated region
    $region26: #{forward.1} parent=1 // pred_check
      _
    $region27: #{forward.1} parent=1 // pred_check_branch
      %60 = sbr.rel (0) target = $region29
    $region28: #{forward.1} parent=1 // pred_region
      %62 = dma.done [#allocation5], 4032
    $region29: #{forward.1} parent=1 // pred_fallthru
      _
    // Predicated region
    $region30: #{forward.1} parent=1 // pred_check
      _
    $region31: #{forward.1} parent=1 // pred_check_branch
      %64 = sbr.rel (0) target = $region33
    $region32: #{forward.1} parent=1 // pred_region
      %66 = dma.done [#allocation5], 2688
    $region33: #{forward.1} parent=1 // pred_fallthru
      _
    %v68 = vld [vmem:[%s2] sm:$0xf]
    %v69 = vunpack.c.l.bf16 %v68
    %v70 = vlaneseq
    %v71 = vshrl.u32 %v70, 7
    %v72 = vadd.s32 %v71, 8
    %v73 = vlaneseq
    %v74 = vand.u32 %v73, 127
    %vm75 = vcmp.eq.s32.totalorder %v71, %v74
    %vm76 = vcmp.eq.s32.totalorder %v72, %v74
    %v77 = vsel %vm75, 1.0, 0.0
    %v78 = vsel %vm76, 1.0, 0.0
    %v79 = vpack.c.bf16 %v78, %v77
    %vm80 = vcmask 130048
    %v82 = vsel %vm80, %v79, 0
    %v85 = vsel %vm80, %v68, 0
    %87 = vmatpush.bf16.xpose.msra.mxu0 0
    %88 = vmatpush.bf16.xpose.msra.mxu0 0
    %89 = vmatpush.bf16.xpose.msra.mxu0 0
    %90 = vmatpush.bf16.xpose.msra.mxu0 0
    %91 = vmatpush.bf16.xpose.msra.mxu0 0
    %92 = vmatpush.bf16.xpose.msra.mxu0 0
    %93 = vmatpush.bf16.xpose.msra.mxu0 0
    %94 = vmatpush.bf16.xpose.msra.mxu0 %v85
    %95 = vmatmul.bf16.gmra.mxu0 %v82
    %v96 = vpop.f32.mrf.mxu0
    %v97 = vadd.f32 0.0, %v96
    %v98 = vpop.f32.mrf.mxu0
    %v99 = vadd.f32 0.0, %v98
    %100 = vdwg.mxu0
    %v101 = vld [vmem:[%s0] sm:$0xff]
    %v102 = vld [vmem:[#allocation4] sm:$0x7]
    %v103 = vpack.c.bf16 %v101, %v101
    %v104 = vld [vmem:[#allocation6] sm:$0x1]
    %v105 = vperm.slane %v104, 0
    %vm106 = vcmask 48128
    %v108 = vsel %vm106, %v103, 0
    %vm110 = vcmask 1042432
    %v112 = vsel %vm110, %v102, 0
    %114 = vmatpush.bf16.msra.mxu0 0
    %115 = vmatpush.bf16.msra.mxu0 0
    %116 = vmatpush.bf16.msra.mxu0 0
    %117 = vmatpush.bf16.msra.mxu0 0
    %118 = vmatpush.bf16.msra.mxu0 0
    %119 = vmatpush.bf16.msra.mxu0 0
    %120 = vmatpush.bf16.msra.mxu0 0
    %121 = vmatpush.bf16.msra.mxu0 %v112
    %122 = vmatmul.bf16.gmra.mxu0 %v108
    %v123 = vpop.f32.mrf.mxu0
    %v124 = vadd.f32 %v105, %v123
    %v125 = vpop.f32.mrf.mxu0
    %126 = vdwg.mxu0
    %v127 = vmax.f32 %v124, 0.0
    %v128 = vld [vmem:[#allocation4 + $0x4] sm:$0xf]
    %v129 = vld [vmem:[#allocation4 + $0x8] sm:$0xf]
    %v130 = vld [vmem:[#allocation4 + $0xc] sm:$0xf]
    %v131 = vld [vmem:[#allocation4 + $0x10] sm:$0xf]
    %v132 = vpack.c.bf16 %v127, %v127
    %v133 = vld [vmem:[#allocation6 + $0x8] sm:$0x1]
    %v134 = vperm.slane %v133, 0
    %v139 = vunpack.c.l.b16 %v128
    %v140 = vunpack.c.l.b16 %v129
    %v141 = vunpack.c.l.b16 %v130
    %v142 = vunpack.c.l.b16 %v131
    %v143 = vpack.c.b16 %v140, %v139
    %v144 = vpack.c.b16 %v142, %v141
    %vm147 = vcmask 261120
    %v149 = vsel %vm147, %v132, 0
    %151 = vmatpush.bf16.msra.mxu0 0
    %152 = vmatpush.bf16.msra.mxu0 0
    %153 = vmatpush.bf16.msra.mxu0 0
    %154 = vmatpush.bf16.msra.mxu0 0
    %155 = vmatpush.bf16.msra.mxu0 0
    %156 = vmatpush.bf16.msra.mxu0 0
    %157 = vmatpush.bf16.msra.mxu0 %v144
    %158 = vmatpush.bf16.msra.mxu0 %v143
    %159 = vmatmul.bf16.gmra.mxu0 %v149
    %v160 = vpop.f32.mrf.mxu0
    %v161 = vadd.f32 %v134, %v160
    %v162 = vpop.f32.mrf.mxu0
    %163 = vdwg.mxu0
    %v164 = vld [vmem:[#allocation2] sm:$0xff]
    %v165 = vld [vmem:[#allocation2 + $0x8] sm:$0xff]
    %v166 = vld [vmem:[#allocation4 + $0x14] sm:$0xf]
    %v167 = vld [vmem:[#allocation4 + $0x18] sm:$0x1]
    %v168 = vpack.c.bf16 %v165, %v164
    %v169 = vld [vmem:[#allocation6 + $0x10] sm:$0x1]
    %v170 = vperm.slane %v169, 0
    %v173 = vunpack.c.l.b16 %v166
    %v174 = vunpack.c.l.b16 %v167
    %v175 = vpack.c.b16 %v174, %v173
    %vm176 = vcmask 80896
    %v178 = vsel %vm176, %v168, 0
    %vm180 = vcmask 1044480
    %v182 = vsel %vm180, %v175, 0
    %184 = vmatpush.bf16.msra.mxu0 0
    %185 = vmatpush.bf16.msra.mxu0 0
    %186 = vmatpush.bf16.msra.mxu0 0
    %187 = vmatpush.bf16.msra.mxu0 0
    %188 = vmatpush.bf16.msra.mxu0 0
    %189 = vmatpush.bf16.msra.mxu0 0
    %190 = vmatpush.bf16.msra.mxu0 0
    %191 = vmatpush.bf16.msra.mxu0 %v182
    %192 = vmatmul.bf16.gmra.mxu0 %v178
    %v193 = vpop.f32.mrf.mxu0
    %v194 = vadd.f32 %v170, %v193
    %v195 = vpop.f32.mrf.mxu0
    %v196 = vadd.f32 %v170, %v195
    %197 = vdwg.mxu0
    %v198 = vmax.f32 %v194, 0.0
    %v199 = vmax.f32 %v196, 0.0
    %v200 = vld [vmem:[#allocation4 + $0x1c] sm:$0xf]
    %v201 = vld [vmem:[#allocation4 + $0x20] sm:$0xf]
    %v202 = vld [vmem:[#allocation4 + $0x24] sm:$0xf]
    %v203 = vld [vmem:[#allocation4 + $0x28] sm:$0xf]
    %v204 = vpack.c.bf16 %v199, %v198
    %v205 = vld [vmem:[#allocation6 + $0x18] sm:$0x1]
    %v206 = vperm.slane %v205, 0
    %v211 = vunpack.c.l.b16 %v200
    %v212 = vunpack.c.l.b16 %v201
    %v213 = vunpack.c.l.b16 %v202
    %v214 = vunpack.c.l.b16 %v203
    %v215 = vpack.c.b16 %v212, %v211
    %v216 = vpack.c.b16 %v214, %v213
    %v220 = vsel %vm147, %v204, 0
    %222 = vmatpush.bf16.msra.mxu0 0
    %223 = vmatpush.bf16.msra.mxu0 0
    %224 = vmatpush.bf16.msra.mxu0 0
    %225 = vmatpush.bf16.msra.mxu0 0
    %226 = vmatpush.bf16.msra.mxu0 0
    %227 = vmatpush.bf16.msra.mxu0 0
    %228 = vmatpush.bf16.msra.mxu0 %v216
    %229 = vmatpush.bf16.msra.mxu0 %v215
    %230 = vmatmul.bf16.gmra.mxu0 %v220
    %v231 = vpop.f32.mrf.mxu0
    %v232 = vadd.f32 %v206, %v231
    %v233 = vpop.f32.mrf.mxu0
    %v234 = vadd.f32 %v206, %v233
    %235 = vdwg.mxu0
    %v236 = vld [vmem:[#allocation4 + $0x2c] sm:$0xf]
    %v237 = vld [vmem:[#allocation4 + $0x30] sm:$0xf]
    %v238 = vld [vmem:[#allocation4 + $0x34] sm:$0xf]
    %v239 = vld [vmem:[#allocation4 + $0x38] sm:$0xf]
    %v240 = vpack.c.bf16 %v161, %v161
    %v245 = vunpack.c.l.b16 %v236
    %v246 = vunpack.c.l.b16 %v237
    %v247 = vunpack.c.l.b16 %v238
    %v248 = vunpack.c.l.b16 %v239
    %v249 = vpack.c.b16 %v246, %v245
    %v250 = vpack.c.b16 %v248, %v247
    %v254 = vsel %vm147, %v240, 0
    %256 = vmatpush.bf16.msra.mxu0 0
    %257 = vmatpush.bf16.msra.mxu0 0
    %258 = vmatpush.bf16.msra.mxu0 0
    %259 = vmatpush.bf16.msra.mxu0 0
    %260 = vmatpush.bf16.msra.mxu0 0
    %261 = vmatpush.bf16.msra.mxu0 0
    %262 = vmatpush.bf16.msra.mxu0 %v250
    %263 = vmatpush.bf16.msra.mxu0 %v249
    %264 = vmatmul.bf16.gmra.mxu0 %v254
    %v265 = vpop.f32.mrf.mxu0
    %v266 = vadd.f32 0.0, %v265
    %v267 = vpop.f32.mrf.mxu0
    %268 = vdwg.mxu0
    %v269 = vld [vmem:[#allocation4 + $0x3c] sm:$0xf]
    %v270 = vld [vmem:[#allocation4 + $0x40] sm:$0xf]
    %v271 = vld [vmem:[#allocation4 + $0x44] sm:$0xf]
    %v272 = vld [vmem:[#allocation4 + $0x48] sm:$0xf]
    %v273 = vpack.c.bf16 %v234, %v232
    %v278 = vunpack.c.l.b16 %v269
    %v279 = vunpack.c.l.b16 %v270
    %v280 = vunpack.c.l.b16 %v271
    %v281 = vunpack.c.l.b16 %v272
    %v282 = vpack.c.b16 %v279, %v278
    %v283 = vpack.c.b16 %v281, %v280
    %v287 = vsel %vm147, %v273, 0
    %289 = vmatpush.bf16.msra.mxu0 0
    %290 = vmatpush.bf16.msra.mxu0 0
    %291 = vmatpush.bf16.msra.mxu0 0
    %292 = vmatpush.bf16.msra.mxu0 0
    %293 = vmatpush.bf16.msra.mxu0 0
    %294 = vmatpush.bf16.msra.mxu0 0
    %295 = vmatpush.bf16.msra.mxu0 %v283
    %296 = vmatpush.bf16.msra.mxu0 %v282
    %297 = vmatmul.bf16.gmra.mxu0 %v287
    %v298 = vpop.f32.mrf.mxu0
    %v299 = vadd.f32 0.0, %v298
    %v300 = vpop.f32.mrf.mxu0
    %v301 = vadd.f32 0.0, %v300
    %302 = vdwg.mxu0
    %v303 = vld [vmem:[#allocation4 + $0x4c] sm:$0xf]
    %v304 = vld [vmem:[#allocation4 + $0x50] sm:$0xf]
    %v305 = vld [vmem:[#allocation4 + $0x54] sm:$0xf]
    %v306 = vld [vmem:[#allocation4 + $0x58] sm:$0xf]
    %v307 = vld [vmem:[#allocation4 + $0x5c] sm:$0xf]
    %v308 = vld [vmem:[#allocation4 + $0x60] sm:$0xf]
    %v309 = vld [vmem:[#allocation4 + $0x64] sm:$0xf]
    %v310 = vld [vmem:[#allocation4 + $0x68] sm:$0xf]
    %v311 = vld [vmem:[#allocation6 + $0x20] sm:$0x1]
    %v312 = vld [vmem:[#allocation6 + $0x28] sm:$0x1]
    %v313 = vld [vmem:[#allocation6 + $0x30] sm:$0x1]
    %v314 = vld [vmem:[#allocation6 + $0x38] sm:$0x1]
    %v315 = vpack.c.bf16 %v266, %v266
    %v316 = vpack.c.bf16 %v301, %v299
    %318 = vrot.lane.b32.xlu0 %v316, 96
    %v319 = vpop.permute.xlu0 %318
    %v321 = vsel %vm147, %v315, 0
    %v324 = vsel %vm147, %v319, 0
    %326 = vmatpush.bf16.xpose.msra.mxu0 0
    %327 = vmatpush.bf16.xpose.msra.mxu0 0
    %328 = vmatpush.bf16.xpose.msra.mxu0 0
    %329 = vmatpush.bf16.xpose.msra.mxu0 0
    %330 = vmatpush.bf16.xpose.msra.mxu0 0
    %331 = vmatpush.bf16.xpose.msra.mxu0 0
    %332 = vmatpush.bf16.xpose.msra.mxu0 0
    %333 = vmatpush.bf16.xpose.msra.mxu0 %v324
    %334 = vmatmul.bf16.gmra.mxu0 %v321
    %v335 = vpop.f32.mrf.mxu0
    %v336 = vadd.f32 0.0, %v335
    %v337 = vpop.f32.mrf.mxu0
    %338 = vdwg.mxu0
    %v339 = vsel %vm80, %v336, -inf
    %340 = vmax.xlane.f32.xlu0 %v339
    %v341 = vpop.xlane.xlu0 %340
    %v342 = vsub.f32 %v336, %v341
    %v343 = vmul.f32 %v342, 1.442695
    %v344 = vpow.pop %v343
    %v345 = vmul.f32 %v344, %v69
    %v346 = vsel %vm80, %v345, 0.0
    %347 = vadd.xlane.f32.xlu0 %v346
    %v348 = vpop.xlane.xlu0 %347
    %v349 = vadd.f32 %v348, 1e-06
    %v350 = vrcp.pop %v349
    %v351 = vmul.f32 %v349, %v350
    %v352 = vsub.f32 1.0, %v351
    %v353 = vmul.f32 %v350, %v352
    %v354 = vadd.f32 %v350, %v353
    %vm355 = vweird.f32 %v349
    %vm356 = vweird.f32 %v350
    %vm357 = vmor %vm355, %vm356
    %v358 = vsel %vm357, %v350, %v354
    %v359 = vand.u32 2147483647, %v349
    %vm360 = vcmp.eq.f32.partialorder %v359, 8.507059e+37
    %v361 = vand.u32 %v349, 2147483648
    %v362 = vor.u32 1.1754944e-38, %v361
    %v363 = vsel %vm360, %v362, %v358
    %v364 = vmul.f32 %v345, %v363
    %v365 = vpack.c.bf16 %v364, %v364
    %366 = vrot.lane.b32.xlu0 %v316, 64
    %v367 = vpop.permute.xlu0 %366
    %v370 = vsel %vm80, %v365, 0
    %372 = vmatpush.bf16.msra.mxu0 0
    %373 = vmatpush.bf16.msra.mxu0 0
    %374 = vmatpush.bf16.msra.mxu0 0
    %375 = vmatpush.bf16.msra.mxu0 0
    %376 = vmatpush.bf16.msra.mxu0 0
    %377 = vmatpush.bf16.msra.mxu0 0
    %378 = vmatpush.bf16.msra.mxu0 0
    %379 = vmatpush.bf16.msra.mxu0 %v367
    %380 = vmatmul.bf16.gmra.mxu0 %v370
    %v381 = vpop.f32.mrf.mxu0
    %v382 = vadd.f32 0.0, %v381
    %v383 = vpop.f32.mrf.mxu0
    %384 = vdwg.mxu0
    %v385 = vadd.f32 %v161, %v382
    %v386 = vsel %vm147, %v385, 0.0
    %387 = vadd.xlane.f32.xlu0 %v386
    %v388 = vpop.xlane.xlu0 %387
    %v389 = vrcp.pop 32.0
    %v390 = vmul.f32 32.0, %v389
    %v391 = vsub.f32 1.0, %v390
    %v392 = vmul.f32 %v389, %v391
    %v393 = vadd.f32 %v389, %v392
    %vm394 = vweird.f32 %v389
    %v395 = vsel %vm394, %v389, %v393
    %v396 = vmul.f32 %v388, %v395
    %v397 = vsub.f32 %v385, %v396
    %v398 = vmul.f32 %v397, %v397
    %v399 = vsel %vm147, %v398, 0.0
    %400 = vadd.xlane.f32.xlu0 %v399
    %v401 = vpop.xlane.xlu0 %400
    %v402 = vmul.f32 %v401, %v395
    %v403 = vadd.f32 %v402, 1e-05
    %v404 = vrsqrt.pop %v403
    %v405 = vmul.f32 %v404, %v403
    %v406 = vmul.f32 %v405, %v404
    %v407 = vmul.f32 0.5, %v406
    %v408 = vsub.f32 1.5, %v407
    %v409 = vmul.f32 %v404, %v408
    %vm410 = vweird.f32 %v403
    %vm411 = vweird.f32 %v404
    %vm412 = vmor %vm410, %vm411
    %v413 = vsel %vm412, %v404, %v409
    %v414 = vmul.f32 %v397, %v413
    %v415 = vperm.slane %v311, 0
    %v416 = vmul.f32 %v414, %v415
    %v417 = vperm.slane %v312, 0
    %v418 = vadd.f32 %v416, %v417
    %v419 = vpack.c.bf16 %v418, %v418
    %v424 = vunpack.c.l.b16 %v303
    %v425 = vunpack.c.l.b16 %v304
    %v426 = vunpack.c.l.b16 %v305
    %v427 = vunpack.c.l.b16 %v306
    %v428 = vpack.c.b16 %v425, %v424
    %v429 = vpack.c.b16 %v427, %v426
    %v433 = vsel %vm147, %v419, 0
    %435 = vmatpush.bf16.msra.mxu0 0
    %436 = vmatpush.bf16.msra.mxu0 0
    %437 = vmatpush.bf16.msra.mxu0 0
    %438 = vmatpush.bf16.msra.mxu0 0
    %439 = vmatpush.bf16.msra.mxu0 0
    %440 = vmatpush.bf16.msra.mxu0 0
    %441 = vmatpush.bf16.msra.mxu0 %v429
    %442 = vmatpush.bf16.msra.mxu0 %v428
    %443 = vmatmul.bf16.gmra.mxu0 %v433
    %v444 = vpop.f32.mrf.mxu0
    %v445 = vadd.f32 0.0, %v444
    %v446 = vpop.f32.mrf.mxu0
    %447 = vdwg.mxu0
    %v448 = vmax.f32 %v445, 0.0
    %v449 = vpack.c.bf16 %v448, %v448
    %v454 = vunpack.c.l.b16 %v307
    %v455 = vunpack.c.l.b16 %v308
    %v456 = vunpack.c.l.b16 %v309
    %v457 = vunpack.c.l.b16 %v310
    %v458 = vpack.c.b16 %v455, %v454
    %v459 = vpack.c.b16 %v457, %v456
    %v463 = vsel %vm147, %v449, 0
    %465 = vmatpush.bf16.msra.mxu0 0
    %466 = vmatpush.bf16.msra.mxu0 0
    %467 = vmatpush.bf16.msra.mxu0 0
    %468 = vmatpush.bf16.msra.mxu0 0
    %469 = vmatpush.bf16.msra.mxu0 0
    %470 = vmatpush.bf16.msra.mxu0 0
    %471 = vmatpush.bf16.msra.mxu0 %v459
    %472 = vmatpush.bf16.msra.mxu0 %v458
    %473 = vmatmul.bf16.gmra.mxu0 %v463
    %v474 = vpop.f32.mrf.mxu0
    %v475 = vadd.f32 0.0, %v474
    %v476 = vpop.f32.mrf.mxu0
    %477 = vdwg.mxu0
    %v478 = vadd.f32 %v418, %v475
    %v479 = vsel %vm147, %v478, 0.0
    %480 = vadd.xlane.f32.xlu0 %v479
    %v481 = vpop.xlane.xlu0 %480
    %v482 = vmul.f32 %v481, %v395
    %v483 = vsub.f32 %v478, %v482
    %v484 = vmul.f32 %v483, %v483
    %v485 = vsel %vm147, %v484, 0.0
    %486 = vadd.xlane.f32.xlu0 %v485
    %v487 = vpop.xlane.xlu0 %486
    %v488 = vmul.f32 %v487, %v395
    %v489 = vadd.f32 %v488, 1e-05
    %v490 = vrsqrt.pop %v489
    %v491 = vmul.f32 %v490, %v489
    %v492 = vmul.f32 %v491, %v490
    %v493 = vmul.f32 0.5, %v492
    %v494 = vsub.f32 1.5, %v493
    %v495 = vmul.f32 %v490, %v494
    %vm496 = vweird.f32 %v489
    %vm497 = vweird.f32 %v490
    %vm498 = vmor %vm496, %vm497
    %v499 = vsel %vm498, %v490, %v495
    %v500 = vmul.f32 %v483, %v499
    %v501 = vperm.slane %v313, 0
    %v502 = vmul.f32 %v500, %v501
    %v503 = vperm.slane %v314, 0
    %v504 = vadd.f32 %v502, %v503
    %v505 = vld [vmem:[#allocation4 + $0x6c] sm:$0xf]
    %v506 = vld [vmem:[#allocation4 + $0x70] sm:$0xf]
    %v507 = vld [vmem:[#allocation4 + $0x74] sm:$0xf]
    %v508 = vld [vmem:[#allocation4 + $0x78] sm:$0xf]
    %v509 = vld [vmem:[#allocation4 + $0x7c] sm:$0xf]
    %v510 = vld [vmem:[#allocation4 + $0x80] sm:$0xf]
    %v511 = vld [vmem:[#allocation4 + $0x84] sm:$0xf]
    %v512 = vld [vmem:[#allocation4 + $0x88] sm:$0xf]
    %v513 = vld [vmem:[#allocation6 + $0x40] sm:$0x1]
    %v514 = vld [vmem:[#allocation6 + $0x48] sm:$0x1]
    %v515 = vld [vmem:[#allocation6 + $0x50] sm:$0x1]
    %v516 = vld [vmem:[#allocation6 + $0x58] sm:$0x1]
    %518 = vrot.lane.b32.xlu0 %v315, 96
    %v519 = vpop.permute.xlu0 %518
    %v521 = vsel %vm147, %v316, 0
    %v524 = vsel %vm147, %v519, 0
    %526 = vmatpush.bf16.xpose.msra.mxu0 0
    %527 = vmatpush.bf16.xpose.msra.mxu0 0
    %528 = vmatpush.bf16.xpose.msra.mxu0 0
    %529 = vmatpush.bf16.xpose.msra.mxu0 0
    %530 = vmatpush.bf16.xpose.msra.mxu0 0
    %531 = vmatpush.bf16.xpose.msra.mxu0 0
    %532 = vmatpush.bf16.xpose.msra.mxu0 0
    %533 = vmatpush.bf16.xpose.msra.mxu0 %v524
    %534 = vmatmul.bf16.gmra.mxu0 %v521
    %v535 = vpop.f32.mrf.mxu0
    %v536 = vadd.f32 0.0, %v535
    %v537 = vpop.f32.mrf.mxu0
    %v538 = vadd.f32 0.0, %v537
    %539 = vdwg.mxu0
    %vm540 = vcmask 64512
    %v541 = vsel %vm540, %v536, -inf
    %542 = vmax.xlane.f32.xlu0 %v541
    %v543 = vpop.xlane.xlu0 %542
    %v544 = vsel %vm540, %v538, -inf
    %545 = vmax.xlane.f32.xlu0 %v544
    %v546 = vpop.xlane.xlu0 %545
    %v547 = vsub.f32 %v536, %v543
    %v548 = vsub.f32 %v538, %v546
    %v549 = vmul.f32 %v547, 1.442695
    %v550 = vpow.pop %v549
    %v551 = vmul.f32 %v548, 1.442695
    %v552 = vpow.pop %v551
    %v553 = vmul.f32 %v550, %v97
    %v554 = vmul.f32 %v552, %v99
    %v555 = vsel %vm540, %v553, 0.0
    %556 = vadd.xlane.f32.xlu0 %v555
    %v557 = vpop.xlane.xlu0 %556
    %v558 = vsel %vm540, %v554, 0.0
    %559 = vadd.xlane.f32.xlu0 %v558
    %v560 = vpop.xlane.xlu0 %559
    %v561 = vadd.f32 %v557, 1e-06
    %v562 = vadd.f32 %v560, 1e-06
    %v563 = vrcp.pop %v561
    %v564 = vmul.f32 %v561, %v563
    %v565 = vsub.f32 1.0, %v564
    %v566 = vmul.f32 %v563, %v565
    %v567 = vadd.f32 %v563, %v566
    %vm568 = vweird.f32 %v561
    %vm569 = vweird.f32 %v563
    %vm570 = vmor %vm568, %vm569
    %v571 = vsel %vm570, %v563, %v567
    %v572 = vand.u32 2147483647, %v561
    %vm573 = vcmp.eq.f32.partialorder %v572, 8.507059e+37
    %v574 = vand.u32 %v561, 2147483648
    %v575 = vor.u32 1.1754944e-38, %v574
    %v576 = vsel %vm573, %v575, %v571
    %v577 = vmul.f32 %v553, %v576
    %v578 = vrcp.pop %v562
    %v579 = vmul.f32 %v562, %v578
    %v580 = vsub.f32 1.0, %v579
    %v581 = vmul.f32 %v578, %v580
    %v582 = vadd.f32 %v578, %v581
    %vm583 = vweird.f32 %v562
    %vm584 = vweird.f32 %v578
    %vm585 = vmor %vm583, %vm584
    %v586 = vsel %vm585, %v578, %v582
    %v587 = vand.u32 2147483647, %v562
    %vm588 = vcmp.eq.f32.partialorder %v587, 8.507059e+37
    %v589 = vand.u32 %v562, 2147483648
    %v590 = vor.u32 1.1754944e-38, %v589
    %v591 = vsel %vm588, %v590, %v586
    %v592 = vmul.f32 %v554, %v591
    %v593 = vpack.c.bf16 %v592, %v577
    %594 = vrot.lane.b32.xlu0 %v315, 64
    %v595 = vpop.permute.xlu0 %594
    %v597 = vsel %vm540, %v593, 0
    %vm599 = vcmask 1043456
    %v601 = vsel %vm599, %v595, 0
    %603 = vmatpush.bf16.msra.mxu0 0
    %604 = vmatpush.bf16.msra.mxu0 0
    %605 = vmatpush.bf16.msra.mxu0 0
    %606 = vmatpush.bf16.msra.mxu0 0
    %607 = vmatpush.bf16.msra.mxu0 0
    %608 = vmatpush.bf16.msra.mxu0 0
    %609 = vmatpush.bf16.msra.mxu0 0
    %610 = vmatpush.bf16.msra.mxu0 %v601
    %611 = vmatmul.bf16.gmra.mxu0 %v597
    %v612 = vpop.f32.mrf.mxu0
    %v613 = vadd.f32 0.0, %v612
    %v614 = vpop.f32.mrf.mxu0
    %v615 = vadd.f32 0.0, %v614
    %616 = vdwg.mxu0
    %v617 = vadd.f32 %v232, %v613
    %v618 = vadd.f32 %v234, %v615
    %v619 = vsel %vm147, %v617, 0.0
    %620 = vadd.xlane.f32.xlu0 %v619
    %v621 = vpop.xlane.xlu0 %620
    %v622 = vsel %vm147, %v618, 0.0
    %623 = vadd.xlane.f32.xlu0 %v622
    %v624 = vpop.xlane.xlu0 %623
    %v625 = vmul.f32 %v621, %v395
    %v626 = vmul.f32 %v624, %v395
    %v627 = vsub.f32 %v617, %v625
    %v628 = vsub.f32 %v618, %v626
    %v629 = vmul.f32 %v627, %v627
    %v630 = vmul.f32 %v628, %v628
    %v631 = vsel %vm147, %v629, 0.0
    %632 = vadd.xlane.f32.xlu0 %v631
    %v633 = vpop.xlane.xlu0 %632
    %v634 = vsel %vm147, %v630, 0.0
    %635 = vadd.xlane.f32.xlu0 %v634
    %v636 = vpop.xlane.xlu0 %635
    %v637 = vmul.f32 %v633, %v395
    %v638 = vmul.f32 %v636, %v395
    %v639 = vadd.f32 %v637, 1e-05
    %v640 = vadd.f32 %v638, 1e-05
    %v641 = vrsqrt.pop %v639
    %v642 = vmul.f32 %v641, %v639
    %v643 = vmul.f32 %v642, %v641
    %v644 = vmul.f32 0.5, %v643
    %v645 = vsub.f32 1.5, %v644
    %v646 = vmul.f32 %v641, %v645
    %vm647 = vweird.f32 %v639
    %vm648 = vweird.f32 %v641
    %vm649 = vmor %vm647, %vm648
    %v650 = vsel %vm649, %v641, %v646
    %v651 = vrsqrt.pop %v640
    %v652 = vmul.f32 %v651, %v640
    %v653 = vmul.f32 %v652, %v651
    %v654 = vmul.f32 0.5, %v653
    %v655 = vsub.f32 1.5, %v654
    %v656 = vmul.f32 %v651, %v655
    %vm657 = vweird.f32 %v640
    %vm658 = vweird.f32 %v651
    %vm659 = vmor %vm657, %vm658
    %v660 = vsel %vm659, %v651, %v656
    %v661 = vmul.f32 %v627, %v650
    %v662 = vmul.f32 %v628, %v660
    %v663 = vperm.slane %v513, 0
    %v664 = vmul.f32 %v661, %v663
    %v665 = vmul.f32 %v662, %v663
    %v666 = vperm.slane %v514, 0
    %v667 = vadd.f32 %v664, %v666
    %v668 = vadd.f32 %v665, %v666
    %v669 = vpack.c.bf16 %v668, %v667
    %v674 = vunpack.c.l.b16 %v505
    %v675 = vunpack.c.l.b16 %v506
    %v676 = vunpack.c.l.b16 %v507
    %v677 = vunpack.c.l.b16 %v508
    %v678 = vpack.c.b16 %v675, %v674
    %v679 = vpack.c.b16 %v677, %v676
    %v683 = vsel %vm147, %v669, 0
    %685 = vmatpush.bf16.msra.mxu0 0
    %686 = vmatpush.bf16.msra.mxu0 0
    %687 = vmatpush.bf16.msra.mxu0 0
    %688 = vmatpush.bf16.msra.mxu0 0
    %689 = vmatpush.bf16.msra.mxu0 0
    %690 = vmatpush.bf16.msra.mxu0 0
    %691 = vmatpush.bf16.msra.mxu0 %v679
    %692 = vmatpush.bf16.msra.mxu0 %v678
    %693 = vmatmul.bf16.gmra.mxu0 %v683
    %v694 = vpop.f32.mrf.mxu0
    %v695 = vadd.f32 0.0, %v694
    %v696 = vpop.f32.mrf.mxu0
    %v697 = vadd.f32 0.0, %v696
    %698 = vdwg.mxu0
    %v699 = vmax.f32 %v695, 0.0
    %v700 = vmax.f32 %v697, 0.0
    %v701 = vpack.c.bf16 %v700, %v699
    %v706 = vunpack.c.l.b16 %v509
    %v707 = vunpack.c.l.b16 %v510
    %v708 = vunpack.c.l.b16 %v511
    %v709 = vunpack.c.l.b16 %v512
    %v710 = vpack.c.b16 %v707, %v706
    %v711 = vpack.c.b16 %v709, %v708
    %v715 = vsel %vm147, %v701, 0
    %717 = vmatpush.bf16.msra.mxu0 0
    %718 = vmatpush.bf16.msra.mxu0 0
    %719 = vmatpush.bf16.msra.mxu0 0
    %720 = vmatpush.bf16.msra.mxu0 0
    %721 = vmatpush.bf16.msra.mxu0 0
    %722 = vmatpush.bf16.msra.mxu0 0
    %723 = vmatpush.bf16.msra.mxu0 %v711
    %724 = vmatpush.bf16.msra.mxu0 %v710
    %725 = vmatmul.bf16.gmra.mxu0 %v715
    %v726 = vpop.f32.mrf.mxu0
    %v727 = vadd.f32 0.0, %v726
    %v728 = vpop.f32.mrf.mxu0
    %v729 = vadd.f32 0.0, %v728
    %730 = vdwg.mxu0
    %v731 = vadd.f32 %v667, %v727
    %v732 = vadd.f32 %v668, %v729
    %v733 = vsel %vm147, %v731, 0.0
    %734 = vadd.xlane.f32.xlu0 %v733
    %v735 = vpop.xlane.xlu0 %734
    %v736 = vsel %vm147, %v732, 0.0
    %737 = vadd.xlane.f32.xlu0 %v736
    %v738 = vpop.xlane.xlu0 %737
    %v739 = vmul.f32 %v735, %v395
    %v740 = vmul.f32 %v738, %v395
    %v741 = vsub.f32 %v731, %v739
    %v742 = vsub.f32 %v732, %v740
    %v743 = vmul.f32 %v741, %v741
    %v744 = vmul.f32 %v742, %v742
    %v745 = vsel %vm147, %v743, 0.0
    %746 = vadd.xlane.f32.xlu0 %v745
    %v747 = vpop.xlane.xlu0 %746
    %v748 = vsel %vm147, %v744, 0.0
    %749 = vadd.xlane.f32.xlu0 %v748
    %v750 = vpop.xlane.xlu0 %749
    %v751 = vmul.f32 %v747, %v395
    %v752 = vmul.f32 %v750, %v395
    %v753 = vadd.f32 %v751, 1e-05
    %v754 = vadd.f32 %v752, 1e-05
    %v755 = vrsqrt.pop %v753
    %v756 = vmul.f32 %v755, %v753
    %v757 = vmul.f32 %v756, %v755
    %v758 = vmul.f32 0.5, %v757
    %v759 = vsub.f32 1.5, %v758
    %v760 = vmul.f32 %v755, %v759
    %vm761 = vweird.f32 %v753
    %vm762 = vweird.f32 %v755
    %vm763 = vmor %vm761, %vm762
    %v764 = vsel %vm763, %v755, %v760
    %v765 = vrsqrt.pop %v754
    %v766 = vmul.f32 %v765, %v754
    %v767 = vmul.f32 %v766, %v765
    %v768 = vmul.f32 0.5, %v767
    %v769 = vsub.f32 1.5, %v768
    %v770 = vmul.f32 %v765, %v769
    %vm771 = vweird.f32 %v754
    %vm772 = vweird.f32 %v765
    %vm773 = vmor %vm771, %vm772
    %v774 = vsel %vm773, %v765, %v770
    %v775 = vmul.f32 %v741, %v764
    %v776 = vmul.f32 %v742, %v774
    %v777 = vperm.slane %v515, 0
    %v778 = vmul.f32 %v775, %v777
    %v779 = vmul.f32 %v776, %v777
    %v780 = vperm.slane %v516, 0
    %v781 = vadd.f32 %v778, %v780
    %v782 = vadd.f32 %v779, %v780
    %v783 = vld [vmem:[#allocation4 + $0x8c] sm:$0xf]
    %v784 = vld [vmem:[#allocation4 + $0x90] sm:$0xf]
    %v785 = vld [vmem:[#allocation4 + $0x94] sm:$0xf]
    %v786 = vld [vmem:[#allocation4 + $0x98] sm:$0xf]
    %v787 = vpack.c.bf16 %v504, %v504
    %v792 = vunpack.c.l.b16 %v783
    %v793 = vunpack.c.l.b16 %v784
    %v794 = vunpack.c.l.b16 %v785
    %v795 = vunpack.c.l.b16 %v786
    %v796 = vpack.c.b16 %v793, %v792
    %v797 = vpack.c.b16 %v795, %v794
    %v801 = vsel %vm147, %v787, 0
    %803 = vmatpush.bf16.msra.mxu0 0
    %804 = vmatpush.bf16.msra.mxu0 0
    %805 = vmatpush.bf16.msra.mxu0 0
    %806 = vmatpush.bf16.msra.mxu0 0
    %807 = vmatpush.bf16.msra.mxu0 0
    %808 = vmatpush.bf16.msra.mxu0 0
    %809 = vmatpush.bf16.msra.mxu0 %v797
    %810 = vmatpush.bf16.msra.mxu0 %v796
    %811 = vmatmul.bf16.gmra.mxu0 %v801
    %v812 = vpop.f32.mrf.mxu0
    %v813 = vadd.f32 0.0, %v812
    %v814 = vpop.f32.mrf.mxu0
    %815 = vdwg.mxu0
    %v816 = vld [vmem:[#allocation4 + $0x9c] sm:$0xf]
    %v817 = vld [vmem:[#allocation4 + $0xa0] sm:$0xf]
    %v818 = vld [vmem:[#allocation4 + $0xa4] sm:$0xf]
    %v819 = vld [vmem:[#allocation4 + $0xa8] sm:$0xf]
    %v820 = vpack.c.bf16 %v782, %v781
    %v825 = vunpack.c.l.b16 %v816
    %v826 = vunpack.c.l.b16 %v817
    %v827 = vunpack.c.l.b16 %v818
    %v828 = vunpack.c.l.b16 %v819
    %v829 = vpack.c.b16 %v826, %v825
    %v830 = vpack.c.b16 %v828, %v827
    %v834 = vsel %vm147, %v820, 0
    %836 = vmatpush.bf16.msra.mxu0 0
    %837 = vmatpush.bf16.msra.mxu0 0
    %838 = vmatpush.bf16.msra.mxu0 0
    %839 = vmatpush.bf16.msra.mxu0 0
    %840 = vmatpush.bf16.msra.mxu0 0
    %841 = vmatpush.bf16.msra.mxu0 0
    %842 = vmatpush.bf16.msra.mxu0 %v830
    %843 = vmatpush.bf16.msra.mxu0 %v829
    %844 = vmatmul.bf16.gmra.mxu0 %v834
    %v845 = vpop.f32.mrf.mxu0
    %v846 = vadd.f32 0.0, %v845
    %v847 = vpop.f32.mrf.mxu0
    %v848 = vadd.f32 0.0, %v847
    %849 = vdwg.mxu0
    %v850 = vld [vmem:[#allocation4 + $0xcc] sm:$0xf]
    %v851 = vld [vmem:[#allocation4 + $0xd0] sm:$0xf]
    %v852 = vld [vmem:[#allocation4 + $0xd4] sm:$0xf]
    %v853 = vld [vmem:[#allocation4 + $0xd8] sm:$0xf]
    %v854 = vld [vmem:[#allocation4 + $0xdc] sm:$0xf]
    %v855 = vld [vmem:[#allocation4 + $0xe0] sm:$0xf]
    %v856 = vld [vmem:[#allocation4 + $0xe4] sm:$0xf]
    %v857 = vld [vmem:[#allocation4 + $0xe8] sm:$0xf]
    %v858 = vld [vmem:[#allocation6 + $0x80] sm:$0x1]
    %v859 = vld [vmem:[#allocation6 + $0x88] sm:$0x1]
    %v860 = vld [vmem:[#allocation6 + $0x90] sm:$0x1]
    %v861 = vld [vmem:[#allocation6 + $0x98] sm:$0x1]
    %v862 = vpack.c.bf16 %v848, %v846
    %v863 = vpack.c.bf16 %v813, %v813
    %865 = vrot.lane.b32.xlu0 %v863, 96
    %v866 = vpop.permute.xlu0 %865
    %v868 = vsel %vm147, %v862, 0
    %v871 = vsel %vm147, %v866, 0
    %873 = vmatpush.bf16.xpose.msra.mxu0 0
    %874 = vmatpush.bf16.xpose.msra.mxu0 0
    %875 = vmatpush.bf16.xpose.msra.mxu0 0
    %876 = vmatpush.bf16.xpose.msra.mxu0 0
    %877 = vmatpush.bf16.xpose.msra.mxu0 0
    %878 = vmatpush.bf16.xpose.msra.mxu0 0
    %879 = vmatpush.bf16.xpose.msra.mxu0 0
    %880 = vmatpush.bf16.xpose.msra.mxu0 %v871
    %881 = vmatmul.bf16.gmra.mxu0 %v868
    %v882 = vpop.f32.mrf.mxu0
    %v883 = vadd.f32 0.0, %v882
    %v884 = vpop.f32.mrf.mxu0
    %v885 = vadd.f32 0.0, %v884
    %886 = vdwg.mxu0
    %v887 = vsel %vm540, %v883, -inf
    %888 = vmax.xlane.f32.xlu0 %v887
    %v889 = vpop.xlane.xlu0 %888
    %v890 = vsel %vm540, %v885, -inf
    %891 = vmax.xlane.f32.xlu0 %v890
    %v892 = vpop.xlane.xlu0 %891
    %v893 = vsub.f32 %v883, %v889
    %v894 = vsub.f32 %v885, %v892
    %v895 = vmul.f32 %v893, 1.442695
    %v896 = vpow.pop %v895
    %v897 = vmul.f32 %v894, 1.442695
    %v898 = vpow.pop %v897
    %v899 = vmul.f32 %v896, %v97
    %v900 = vmul.f32 %v898, %v99
    %v901 = vsel %vm540, %v899, 0.0
    %902 = vadd.xlane.f32.xlu0 %v901
    %v903 = vpop.xlane.xlu0 %902
    %v904 = vsel %vm540, %v900, 0.0
    %905 = vadd.xlane.f32.xlu0 %v904
    %v906 = vpop.xlane.xlu0 %905
    %v907 = vadd.f32 %v903, 1e-06
    %v908 = vadd.f32 %v906, 1e-06
    %v909 = vrcp.pop %v907
    %v910 = vmul.f32 %v907, %v909
    %v911 = vsub.f32 1.0, %v910
    %v912 = vmul.f32 %v909, %v911
    %v913 = vadd.f32 %v909, %v912
    %vm914 = vweird.f32 %v907
    %vm915 = vweird.f32 %v909
    %vm916 = vmor %vm914, %vm915
    %v917 = vsel %vm916, %v909, %v913
    %v918 = vand.u32 2147483647, %v907
    %vm919 = vcmp.eq.f32.partialorder %v918, 8.507059e+37
    %v920 = vand.u32 %v907, 2147483648
    %v921 = vor.u32 1.1754944e-38, %v920
    %v922 = vsel %vm919, %v921, %v917
    %v923 = vmul.f32 %v899, %v922
    %v924 = vrcp.pop %v908
    %v925 = vmul.f32 %v908, %v924
    %v926 = vsub.f32 1.0, %v925
    %v927 = vmul.f32 %v924, %v926
    %v928 = vadd.f32 %v924, %v927
    %vm929 = vweird.f32 %v908
    %vm930 = vweird.f32 %v924
    %vm931 = vmor %vm929, %vm930
    %v932 = vsel %vm931, %v924, %v928
    %v933 = vand.u32 2147483647, %v908
    %vm934 = vcmp.eq.f32.partialorder %v933, 8.507059e+37
    %v935 = vand.u32 %v908, 2147483648
    %v936 = vor.u32 1.1754944e-38, %v935
    %v937 = vsel %vm934, %v936, %v932
    %v938 = vmul.f32 %v900, %v937
    %v939 = vpack.c.bf16 %v938, %v923
    %940 = vrot.lane.b32.xlu0 %v863, 64
    %v941 = vpop.permute.xlu0 %940
    %v943 = vsel %vm540, %v939, 0
    %v946 = vsel %vm599, %v941, 0
    %948 = vmatpush.bf16.msra.mxu0 0
    %949 = vmatpush.bf16.msra.mxu0 0
    %950 = vmatpush.bf16.msra.mxu0 0
    %951 = vmatpush.bf16.msra.mxu0 0
    %952 = vmatpush.bf16.msra.mxu0 0
    %953 = vmatpush.bf16.msra.mxu0 0
    %954 = vmatpush.bf16.msra.mxu0 0
    %955 = vmatpush.bf16.msra.mxu0 %v946
    %956 = vmatmul.bf16.gmra.mxu0 %v943
    %v957 = vpop.f32.mrf.mxu0
    %v958 = vadd.f32 0.0, %v957
    %v959 = vpop.f32.mrf.mxu0
    %v960 = vadd.f32 0.0, %v959
    %961 = vdwg.mxu0
    %v962 = vadd.f32 %v781, %v958
    %v963 = vadd.f32 %v782, %v960
    %v964 = vsel %vm147, %v962, 0.0
    %965 = vadd.xlane.f32.xlu0 %v964
    %v966 = vpop.xlane.xlu0 %965
    %v967 = vsel %vm147, %v963, 0.0
    %968 = vadd.xlane.f32.xlu0 %v967
    %v969 = vpop.xlane.xlu0 %968
    %v970 = vmul.f32 %v966, %v395
    %v971 = vmul.f32 %v969, %v395
    %v972 = vsub.f32 %v962, %v970
    %v973 = vsub.f32 %v963, %v971
    %v974 = vmul.f32 %v972, %v972
    %v975 = vmul.f32 %v973, %v973
    %v976 = vsel %vm147, %v974, 0.0
    %977 = vadd.xlane.f32.xlu0 %v976
    %v978 = vpop.xlane.xlu0 %977
    %v979 = vsel %vm147, %v975, 0.0
    %980 = vadd.xlane.f32.xlu0 %v979
    %v981 = vpop.xlane.xlu0 %980
    %v982 = vmul.f32 %v978, %v395
    %v983 = vmul.f32 %v981, %v395
    %v984 = vadd.f32 %v982, 1e-05
    %v985 = vadd.f32 %v983, 1e-05
    %v986 = vrsqrt.pop %v984
    %v987 = vmul.f32 %v986, %v984
    %v988 = vmul.f32 %v987, %v986
    %v989 = vmul.f32 0.5, %v988
    %v990 = vsub.f32 1.5, %v989
    %v991 = vmul.f32 %v986, %v990
    %vm992 = vweird.f32 %v984
    %vm993 = vweird.f32 %v986
    %vm994 = vmor %vm992, %vm993
    %v995 = vsel %vm994, %v986, %v991
    %v996 = vrsqrt.pop %v985
    %v997 = vmul.f32 %v996, %v985
    %v998 = vmul.f32 %v997, %v996
    %v999 = vmul.f32 0.5, %v998
    %v1000 = vsub.f32 1.5, %v999
    %v1001 = vmul.f32 %v996, %v1000
    %vm1002 = vweird.f32 %v985
    %vm1003 = vweird.f32 %v996
    %vm1004 = vmor %vm1002, %vm1003
    %v1005 = vsel %vm1004, %v996, %v1001
    %v1006 = vmul.f32 %v972, %v995
    %v1007 = vmul.f32 %v973, %v1005
    %v1008 = vperm.slane %v858, 0
    %v1009 = vmul.f32 %v1006, %v1008
    %v1010 = vmul.f32 %v1007, %v1008
    %v1011 = vperm.slane %v859, 0
    %v1012 = vadd.f32 %v1009, %v1011
    %v1013 = vadd.f32 %v1010, %v1011
    %v1014 = vpack.c.bf16 %v1013, %v1012
    %v1019 = vunpack.c.l.b16 %v850
    %v1020 = vunpack.c.l.b16 %v851
    %v1021 = vunpack.c.l.b16 %v852
    %v1022 = vunpack.c.l.b16 %v853
    %v1023 = vpack.c.b16 %v1020, %v1019
    %v1024 = vpack.c.b16 %v1022, %v1021
    %v1028 = vsel %vm147, %v1014, 0
    %1030 = vmatpush.bf16.msra.mxu0 0
    %1031 = vmatpush.bf16.msra.mxu0 0
    %1032 = vmatpush.bf16.msra.mxu0 0
    %1033 = vmatpush.bf16.msra.mxu0 0
    %1034 = vmatpush.bf16.msra.mxu0 0
    %1035 = vmatpush.bf16.msra.mxu0 0
    %1036 = vmatpush.bf16.msra.mxu0 %v1024
    %1037 = vmatpush.bf16.msra.mxu0 %v1023
    %1038 = vmatmul.bf16.gmra.mxu0 %v1028
    %v1039 = vpop.f32.mrf.mxu0
    %v1040 = vadd.f32 0.0, %v1039
    %v1041 = vpop.f32.mrf.mxu0
    %v1042 = vadd.f32 0.0, %v1041
    %1043 = vdwg.mxu0
    %v1044 = vmax.f32 %v1040, 0.0
    %v1045 = vmax.f32 %v1042, 0.0
    %v1046 = vpack.c.bf16 %v1045, %v1044
    %v1051 = vunpack.c.l.b16 %v854
    %v1052 = vunpack.c.l.b16 %v855
    %v1053 = vunpack.c.l.b16 %v856
    %v1054 = vunpack.c.l.b16 %v857
    %v1055 = vpack.c.b16 %v1052, %v1051
    %v1056 = vpack.c.b16 %v1054, %v1053
    %v1060 = vsel %vm147, %v1046, 0
    %1062 = vmatpush.bf16.msra.mxu0 0
    %1063 = vmatpush.bf16.msra.mxu0 0
    %1064 = vmatpush.bf16.msra.mxu0 0
    %1065 = vmatpush.bf16.msra.mxu0 0
    %1066 = vmatpush.bf16.msra.mxu0 0
    %1067 = vmatpush.bf16.msra.mxu0 0
    %1068 = vmatpush.bf16.msra.mxu0 %v1056
    %1069 = vmatpush.bf16.msra.mxu0 %v1055
    %1070 = vmatmul.bf16.gmra.mxu0 %v1060
    %v1071 = vpop.f32.mrf.mxu0
    %v1072 = vadd.f32 0.0, %v1071
    %v1073 = vpop.f32.mrf.mxu0
    %v1074 = vadd.f32 0.0, %v1073
    %1075 = vdwg.mxu0
    %v1076 = vadd.f32 %v1012, %v1072
    %v1077 = vadd.f32 %v1013, %v1074
    %v1078 = vsel %vm147, %v1076, 0.0
    %1079 = vadd.xlane.f32.xlu0 %v1078
    %v1080 = vpop.xlane.xlu0 %1079
    %v1081 = vsel %vm147, %v1077, 0.0
    %1082 = vadd.xlane.f32.xlu0 %v1081
    %v1083 = vpop.xlane.xlu0 %1082
    %v1084 = vmul.f32 %v1080, %v395
    %v1085 = vmul.f32 %v1083, %v395
    %v1086 = vsub.f32 %v1076, %v1084
    %v1087 = vsub.f32 %v1077, %v1085
    %v1088 = vmul.f32 %v1086, %v1086
    %v1089 = vmul.f32 %v1087, %v1087
    %v1090 = vsel %vm147, %v1088, 0.0
    %1091 = vadd.xlane.f32.xlu0 %v1090
    %v1092 = vpop.xlane.xlu0 %1091
    %v1093 = vsel %vm147, %v1089, 0.0
    %1094 = vadd.xlane.f32.xlu0 %v1093
    %v1095 = vpop.xlane.xlu0 %1094
    %v1096 = vmul.f32 %v1092, %v395
    %v1097 = vmul.f32 %v1095, %v395
    %v1098 = vadd.f32 %v1096, 1e-05
    %v1099 = vadd.f32 %v1097, 1e-05
    %v1100 = vrsqrt.pop %v1098
    %v1101 = vmul.f32 %v1100, %v1098
    %v1102 = vmul.f32 %v1101, %v1100
    %v1103 = vmul.f32 0.5, %v1102
    %v1104 = vsub.f32 1.5, %v1103
    %v1105 = vmul.f32 %v1100, %v1104
    %vm1106 = vweird.f32 %v1098
    %vm1107 = vweird.f32 %v1100
    %vm1108 = vmor %vm1106, %vm1107
    %v1109 = vsel %vm1108, %v1100, %v1105
    %v1110 = vrsqrt.pop %v1099
    %v1111 = vmul.f32 %v1110, %v1099
    %v1112 = vmul.f32 %v1111, %v1110
    %v1113 = vmul.f32 0.5, %v1112
    %v1114 = vsub.f32 1.5, %v1113
    %v1115 = vmul.f32 %v1110, %v1114
    %vm1116 = vweird.f32 %v1099
    %vm1117 = vweird.f32 %v1110
    %vm1118 = vmor %vm1116, %vm1117
    %v1119 = vsel %vm1118, %v1110, %v1115
    %v1120 = vmul.f32 %v1086, %v1109
    %v1121 = vmul.f32 %v1087, %v1119
    %v1122 = vperm.slane %v860, 0
    %v1123 = vmul.f32 %v1120, %v1122
    %v1124 = vmul.f32 %v1121, %v1122
    %v1125 = vperm.slane %v861, 0
    %v1126 = vadd.f32 %v1123, %v1125
    %v1127 = vadd.f32 %v1124, %v1125
    %v1128 = vld [vmem:[#allocation4 + $0xec] sm:$0xf]
    %v1129 = vld [vmem:[#allocation4 + $0xf0] sm:$0xf]
    %v1130 = vld [vmem:[#allocation4 + $0xf4] sm:$0xf]
    %v1131 = vld [vmem:[#allocation4 + $0xf8] sm:$0xf]
    %v1132 = vpack.c.bf16 %v1127, %v1126
    %v1133 = vld [vmem:[#allocation6 + $0xa0] sm:$0x1]
    %v1134 = vperm.slane %v1133, 0
    %v1139 = vunpack.c.l.b16 %v1128
    %v1140 = vunpack.c.l.b16 %v1129
    %v1141 = vunpack.c.l.b16 %v1130
    %v1142 = vunpack.c.l.b16 %v1131
    %v1143 = vpack.c.b16 %v1140, %v1139
    %v1144 = vpack.c.b16 %v1142, %v1141
    %v1148 = vsel %vm147, %v1132, 0
    %1150 = vmatpush.bf16.msra.mxu0 0
    %1151 = vmatpush.bf16.msra.mxu0 0
    %1152 = vmatpush.bf16.msra.mxu0 0
    %1153 = vmatpush.bf16.msra.mxu0 0
    %1154 = vmatpush.bf16.msra.mxu0 0
    %1155 = vmatpush.bf16.msra.mxu0 0
    %1156 = vmatpush.bf16.msra.mxu0 %v1144
    %1157 = vmatpush.bf16.msra.mxu0 %v1143
    %1158 = vmatmul.bf16.gmra.mxu0 %v1148
    %v1159 = vpop.f32.mrf.mxu0
    %v1160 = vadd.f32 %v1134, %v1159
    %v1161 = vpop.f32.mrf.mxu0
    %v1162 = vadd.f32 %v1134, %v1161
    %1163 = vdwg.mxu0
    %1164 = vmax.xlane.f32.xlu0 %v1160
    %v1165 = vpop.xlane.xlu0 %1164
    %1166 = vmax.xlane.f32.xlu0 %v1162
    %v1167 = vpop.xlane.xlu0 %1166
    %v1168 = vsub.f32 %v1160, %v1165
    %v1169 = vsub.f32 %v1162, %v1167
    %v1170 = vmul.f32 %v1168, 1.442695
    %v1171 = vpow.pop %v1170
    %v1172 = vmul.f32 %v1169, 1.442695
    %v1173 = vpow.pop %v1172
    %1174 = vadd.xlane.f32.xlu0 %v1171
    %v1175 = vpop.xlane.xlu0 %1174
    %1176 = vadd.xlane.f32.xlu0 %v1173
    %v1177 = vpop.xlane.xlu0 %1176
    %v1178 = vrcp.pop %v1175
    %v1179 = vmul.f32 %v1175, %v1178
    %v1180 = vsub.f32 1.0, %v1179
    %v1181 = vmul.f32 %v1178, %v1180
    %v1182 = vadd.f32 %v1178, %v1181
    %vm1183 = vweird.f32 %v1175
    %vm1184 = vweird.f32 %v1178
    %vm1185 = vmor %vm1183, %vm1184
    %v1186 = vsel %vm1185, %v1178, %v1182
    %v1187 = vand.u32 2147483647, %v1175
    %vm1188 = vcmp.eq.f32.partialorder %v1187, 8.507059e+37
    %v1189 = vand.u32 %v1175, 2147483648
    %v1190 = vor.u32 1.1754944e-38, %v1189
    %v1191 = vsel %vm1188, %v1190, %v1186
    %v1192 = vmul.f32 %v1171, %v1191
    %v1193 = vrcp.pop %v1177
    %v1194 = vmul.f32 %v1177, %v1193
    %v1195 = vsub.f32 1.0, %v1194
    %v1196 = vmul.f32 %v1193, %v1195
    %v1197 = vadd.f32 %v1193, %v1196
    %vm1198 = vweird.f32 %v1177
    %vm1199 = vweird.f32 %v1193
    %vm1200 = vmor %vm1198, %vm1199
    %v1201 = vsel %vm1200, %v1193, %v1197
    %v1202 = vand.u32 2147483647, %v1177
    %vm1203 = vcmp.eq.f32.partialorder %v1202, 8.507059e+37
    %v1204 = vand.u32 %v1177, 2147483648
    %v1205 = vor.u32 1.1754944e-38, %v1204
    %v1206 = vsel %vm1203, %v1205, %v1201
    %v1207 = vmul.f32 %v1173, %v1206
    %1208 = vst [vmem:[%s5] sm:$0xff] %v1192
    %1209 = vst [vmem:[%s5 + $0x8] sm:$0xff] %v1207
    // Predicated region
    $region34: #{forward.1} parent=1 // pred_check
      _
    $region35: #{forward.1} parent=1 // pred_check_branch
      %1211 = sbr.rel (0) target = $region37
    $region36: #{forward.1} parent=1 // pred_region
      _
    $region37: #{forward.1} parent=1 // pred_fallthru
      _
    // Predicated region
    $region38: #{forward.1} parent=1 // pred_check
      _
    $region39: #{forward.1} parent=1 // pred_check_branch
      %1213 = sbr.rel (0) target = $region41
    $region40: #{forward.1} parent=1 // pred_region
      _
    $region41: #{forward.1} parent=1 // pred_fallthru
      _
    %1214 = vsyncpa [#allocation3], 1
    %1215 = vsyncpa [#allocation5], 1

</llo_original>
